<compile_context>
chip_gen: v7x
topology: tpu7x:2x2x1
jax: 0.10.0
libtpu: 0.0.40
codegen_flags: <defaults>
</compile_context>

<pallas_src>
import math
import functools
import jax
import jax.numpy as jnp
from jax.experimental import pallas as pl
from jax.experimental.pallas import tpu as pltpu

LANE = 128  # channel padding multiple (TPU lane width)


def _ceil_to(x, m):
    return -(-x // m) * m


def _pick_vmem_limit():
    """Generation-aware scoped-VMEM limit (96 MiB on 128 MiB parts, 48 MiB on v7x)."""
    cap = None
    try:
        info = pltpu.get_tpu_info()
        cap = getattr(info, "vmem_capacity_bytes", None)
    except Exception:
        cap = None
    if not cap:
        cap = 128 * 1024 * 1024
    return int(min(96 * 1024 * 1024, max(32 * 1024 * 1024, (cap * 3) // 4)))


VMEM_LIMIT = _pick_vmem_limit()


# ----------------------------------------------------------------------------
# PF ("padded-flat") layout helpers.
#
# An activation of logical shape (N, H, W, C) is stored as (N, LP, C) with
# Wp = W + 2 and LP = (H + 3) * Wp; pixel (h, w) lives at flat row
# (h + 1) * Wp + (w + 1) and every other row is zero (this bakes in the pad=1
# zero ring used by every 3x3 stride-1 conv / the 3x3 maxpool, plus one spare
# row so all tap slices stay in bounds).  Stride-1 layers chain in this layout
# with zero XLA glue between them.
# ----------------------------------------------------------------------------
def pf_dims(H, W):
    Wp = W + 2
    return Wp, (H + 3) * Wp


def pf_mask(H, W):
    """(LP, 1) f32 mask: 1.0 at valid pixel rows, 0.0 at pad rows."""
    Wp, LP = pf_dims(H, W)
    m = jnp.zeros((H + 3, Wp), jnp.float32)
    m = m.at[1:H + 1, 1:W + 1].set(1.0)
    return m.reshape(LP, 1)


# ----------------------------------------------------------------------------
# Stem: 7x7 / stride-1 / pad-3 conv as one im2col GEMM, fused BN + ReLU, PF out.
# ----------------------------------------------------------------------------
def _stem_kernel(x_ref, w_ref, s_ref, b_ref, m_ref, o_ref):
    y = jnp.dot(x_ref[0], w_ref[...], preferred_element_type=jnp.float32)
    y = y * s_ref[...] + b_ref[...]
    y = jnp.maximum(y, 0.0)
    y = y * m_ref[...]          # pad rows (zero patches) -> exactly zero
    o_ref[0] = y.astype(o_ref.dtype)


def stem_conv_pf(x, w_im2col, bn, kh=7, kw=7, pad=3):
    scale, bias = bn
    N, H, W, C = x.shape
    Wp, LP = pf_dims(H, W)
    Kp, cout_p = w_im2col.shape
    xp = jnp.pad(x, ((0, 0), (pad, pad), (pad, pad), (0, 0)))
    cols = [xp[:, i:i + H, j:j + W, :] for i in range(kh) for j in range(kw)]
    patches = jnp.concatenate(cols, axis=-1)                      # (N,H,W,kh*kw*C)
    patches = jnp.pad(patches, ((0, 0), (1, 2), (1, 1),
                                (0, Kp - kh * kw * C)))           # PF rows + K pad
    patches = patches.reshape(N, LP, Kp).astype(jnp.bfloat16)
    mask = pf_mask(H, W)
    return pl.pallas_call(
        _stem_kernel,
        out_shape=jax.ShapeDtypeStruct((N, LP, cout_p), jnp.bfloat16),
        grid_spec=pltpu.PrefetchScalarGridSpec(
            num_scalar_prefetch=0, grid=(N,),
            in_specs=[
                pl.BlockSpec((1, LP, Kp), lambda n: (n, 0, 0)),
                pl.BlockSpec((Kp, cout_p), lambda n: (0, 0)),
                pl.BlockSpec((1, cout_p), lambda n: (0, 0)),
                pl.BlockSpec((1, cout_p), lambda n: (0, 0)),
                pl.BlockSpec((LP, 1), lambda n: (0, 0)),
            ],
            out_specs=pl.BlockSpec((1, LP, cout_p), lambda n: (n, 0, 0)),
        ),
        compiler_params=pltpu.CompilerParams(
            dimension_semantics=("parallel",),
            vmem_limit_bytes=VMEM_LIMIT),
    )(patches, w_im2col, scale, bias, mask)


# ----------------------------------------------------------------------------
# 3x3 / stride-1 / pad-1 maxpool: shifted in-kernel maxes, PF in / PF out.
# (Inputs are post-ReLU >= 0, so the PF zero ring behaves like -inf padding.)
# ----------------------------------------------------------------------------
def _make_pool_kernel(starts, Wp, mw, LP):
    def kernel(x_ref, m_ref, o_ref):
        m = None
        for st in starts:
            v = x_ref[0, st:st + mw, :]
            m = v if m is None else jnp.maximum(m, v)
        m = m * m_ref[Wp + 1:Wp + 1 + mw, :].astype(m.dtype)
        c = o_ref.shape[-1]
        o_ref[0, pl.ds(0, Wp + 1), :] = jnp.zeros((Wp + 1, c), o_ref.dtype)
        o_ref[0, pl.ds(Wp + 1, mw), :] = m.astype(o_ref.dtype)
        o_ref[0, pl.ds(Wp + 1 + mw, LP - Wp - 1 - mw), :] = jnp.zeros(
            (LP - Wp - 1 - mw, c), o_ref.dtype)
    return kernel


def maxpool3x3_s1_pf(x_pf, H, W):
    N, LP, C = x_pf.shape
    Wp, LP2 = pf_dims(H, W)
    assert LP == LP2
    mw = H * Wp
    starts = [i * Wp + j for i in range(3) for j in range(3)]
    mask = pf_mask(H, W)
    return pl.pallas_call(
        _make_pool_kernel(starts, Wp, mw, LP),
        out_shape=jax.ShapeDtypeStruct((N, LP, C), x_pf.dtype),
        grid_spec=pltpu.PrefetchScalarGridSpec(
            num_scalar_prefetch=0, grid=(N,),
            in_specs=[pl.BlockSpec((1, LP, C), lambda n: (n, 0, 0)),
                      pl.BlockSpec((LP, 1), lambda n: (0, 0))],
            out_specs=pl.BlockSpec((1, LP, C), lambda n: (n, 0, 0)),
        ),
        compiler_params=pltpu.CompilerParams(
            dimension_semantics=("parallel",),
            vmem_limit_bytes=VMEM_LIMIT),
    )(x_pf, mask)


# ----------------------------------------------------------------------------
# Stride-1 conv (3x3 p1 or 1x1 p0) + folded BN (+residual) (+ReLU), PF -> PF.
# ----------------------------------------------------------------------------
def _make_conv_pf_kernel(starts, Wp, mw, LP, relu, has_res):
    def kernel(x_ref, w_ref, s_ref, b_ref, m_ref, *rest):
        if has_res:
            r_ref, o_ref = rest
        else:
            (o_ref,) = rest
        acc = None
        for t, st in starts:                       # pure acc += dot chain (MXU)
            d = jnp.dot(x_ref[0, st:st + mw, :], w_ref[t],
                        preferred_element_type=jnp.float32)
            acc = d if acc is None else acc + d
        y = acc * s_ref[...] + b_ref[...]
        if has_res:
            y = y + r_ref[0, Wp + 1:Wp + 1 + mw, :].astype(jnp.float32)
        if relu:
            y = jnp.maximum(y, 0.0)
        y = y * m_ref[Wp + 1:Wp + 1 + mw, :]
        c = o_ref.shape[-1]
        o_ref[0, pl.ds(0, Wp + 1), :] = jnp.zeros((Wp + 1, c), o_ref.dtype)
        o_ref[0, pl.ds(Wp + 1, mw), :] = y.astype(o_ref.dtype)
        o_ref[0, pl.ds(Wp + 1 + mw, LP - Wp - 1 - mw), :] = jnp.zeros(
            (LP - Wp - 1 - mw, c), o_ref.dtype)
    return kernel


def conv_pf(x_pf, H, W, w, bn, relu, residual=None):
    scale, bias = bn
    N, LP, cin_p = x_pf.shape
    Wp, LP2 = pf_dims(H, W)
    assert LP == LP2
    kk, cin_w, cout_p = w.shape
    assert cin_w == cin_p
    mw = H * Wp
    if kk == 9:
        starts = [(i * 3 + j, i * Wp + j) for i in range(3) for j in range(3)]
    elif kk == 1:
        starts = [(0, Wp + 1)]
    else:
        raise NotImplementedError(kk)
    mask = pf_mask(H, W)

    tcout = min(cout_p, 512)
    nj = cout_p // tcout

    # Keep the larger operand resident across the fast grid axis (Pallas only
    # re-DMAs a block when its index changes between consecutive steps).
    wbytes = kk * cin_p * tcout * 2
    xbytes = LP * cin_p * 2
    cost_nj_fast = N * xbytes + N * nj * wbytes     # grid (N, nj): x resident
    cost_n_fast = nj * wbytes + N * nj * xbytes     # grid (nj, N): w resident
    if cost_n_fast <= cost_nj_fast:
        grid = (nj, N)
        x_map = lambda j, n: (n, 0, 0)
        w_map = lambda j, n: (0, 0, j)
        v_map = lambda j, n: (0, j)
        m_map = lambda j, n: (0, 0)
        o_map = lambda j, n: (n, 0, j)
    else:
        grid = (N, nj)
        x_map = lambda n, j: (n, 0, 0)
        w_map = lambda n, j: (0, 0, j)
        v_map = lambda n, j: (0, j)
        m_map = lambda n, j: (0, 0)
        o_map = lambda n, j: (n, 0, j)

    in_specs = [
        pl.BlockSpec((1, LP, cin_p), x_map),
        pl.BlockSpec((kk, cin_p, tcout), w_map),
        pl.BlockSpec((1, tcout), v_map),
        pl.BlockSpec((1, tcout), v_map),
        pl.BlockSpec((LP, 1), m_map),
    ]
    args = [x_pf, w, scale, bias, mask]
    if residual is not None:
        in_specs.append(pl.BlockSpec((1, LP, tcout), o_map))
        args.append(residual)

    return pl.pallas_call(
        _make_conv_pf_kernel(starts, Wp, mw, LP, relu, residual is not None),
        out_shape=jax.ShapeDtypeStruct((N, LP, cout_p), jnp.bfloat16),
        grid_spec=pltpu.PrefetchScalarGridSpec(
            num_scalar_prefetch=0, grid=grid,
            in_specs=in_specs,
            out_specs=pl.BlockSpec((1, LP, tcout), o_map),
        ),
        compiler_params=pltpu.CompilerParams(
            dimension_semantics=("parallel", "parallel"),
            vmem_limit_bytes=VMEM_LIMIT),
    )(*args)


# ----------------------------------------------------------------------------
# Stride-2 convs (only at the two downsampling boundaries): phase split in XLA,
# fused tap-matmul + BN (+ReLU) kernel producing a "wide" output, then a cheap
# XLA wide -> PF re-layout.
# ----------------------------------------------------------------------------
def _make_conv_wide_kernel(taps, mw, relu):
    def kernel(x_ref, w_ref, s_ref, b_ref, o_ref):
        acc = None
        for t, pidx, st in taps:
            d = jnp.dot(x_ref[0, pidx, st:st + mw, :], w_ref[t],
                        preferred_element_type=jnp.float32)
            acc = d if acc is None else acc + d
        y = acc * s_ref[...] + b_ref[...]
        if relu:
            y = jnp.maximum(y, 0.0)
        o_ref[0] = y.astype(o_ref.dtype)
    return kernel


def phase_split_s2(x_pf, H, W):
    """PF activation -> stride-2 phase tensor of the pad-1 padded image."""
    N, LP, C = x_pf.shape
    Wp, _ = pf_dims(H, W)
    img = x_pf.reshape(N, H + 3, Wp, C)[:, :H + 2, :, :]     # padded image (pad=1)
    Hp, Wq = H + 2, Wp
    Hpp, Wpp = -(-Hp // 2), -(-Wq // 2)
    phases = []
    for a in range(2):
        for b in range(2):
            ph = img[:, a::2, b::2, :]
            ph = jnp.pad(ph, ((0, 0), (0, Hpp + 1 - ph.shape[1]),
                              (0, Wpp - ph.shape[2]), (0, 0)))
            phases.append(ph.reshape(N, (Hpp + 1) * Wpp, C))
    return jnp.stack(phases, axis=1), Hpp, Wpp


def wide_to_pf(out_w, Ho, Wo, Wpp):
    N, _, C = out_w.shape
    v = out_w.reshape(N, Ho, Wpp, C)[:, :, :Wo, :]
    v = jnp.pad(v, ((0, 0), (1, 2), (1, 1), (0, 0)))
    return v.reshape(N, (Ho + 3) * (Wo + 2), C)


def conv_s2(x_ph, Wpp, H, W, w, bn, relu):
    """stride-2 conv (3x3 p1 or 1x1 p0) + folded BN (+ReLU); PF output."""
    scale, bias = bn
    N, nph, Lp, cin_p = x_ph.shape
    kk, cin_w, cout_p = w.shape
    assert cin_w == cin_p
    Ho = (H - 1) // 2 + 1
    Wo = (W - 1) // 2 + 1
    mw = Ho * Wpp
    if kk == 9:
        taps = [(i * 3 + j, (i % 2) * 2 + (j % 2), (i // 2) * Wpp + (j // 2))
                for i in range(3) for j in range(3)]
    elif kk == 1:
        taps = [(0, 3, 0)]      # phase (1,1), offset 0 == x[2h, 2w]
    else:
        raise NotImplementedError(kk)
    tcout = min(cout_p, 512)
    nj = cout_p // tcout
    out_w = pl.pallas_call(
        _make_conv_wide_kernel(taps, mw, relu),
        out_shape=jax.ShapeDtypeStruct((N, mw, cout_p), jnp.bfloat16),
        grid_spec=pltpu.PrefetchScalarGridSpec(
            num_scalar_prefetch=0, grid=(N, nj),
            in_specs=[
                pl.BlockSpec((1, nph, Lp, cin_p), lambda n, j: (n, 0, 0, 0)),
                pl.BlockSpec((kk, cin_p, tcout), lambda n, j: (0, 0, j)),
                pl.BlockSpec((1, tcout), lambda n, j: (0, j)),
                pl.BlockSpec((1, tcout), lambda n, j: (0, j)),
            ],
            out_specs=pl.BlockSpec((1, mw, tcout), lambda n, j: (n, 0, j)),
        ),
        compiler_params=pltpu.CompilerParams(
            dimension_semantics=("parallel", "parallel"),
            vmem_limit_bytes=VMEM_LIMIT),
    )(x_ph, w, scale, bias)
    return wide_to_pf(out_w, Ho, Wo, Wpp), Ho, Wo


# ----------------------------------------------------------------------------
# Fused stride-1 BasicBlock: conv1+BN+ReLU -> VMEM scratch (PF layout) ->
# conv2+BN + (optional fused 1x1 downsample) + residual + ReLU, one pallas_call.
# ----------------------------------------------------------------------------
def _make_basic_block_kernel(Wp, mw, LP, has_ds):
    starts = [(i * 3 + j, i * Wp + j) for i in range(3) for j in range(3)]

    def kernel(x_ref, w1_ref, s1_ref, b1_ref, w2_ref, s2_ref, b2_ref,
               m_ref, *rest):
        if has_ds:
            wd_ref, sd_ref, bd_ref, o_ref, mid = rest
        else:
            o_ref, mid = rest
        msk = m_ref[Wp + 1:Wp + 1 + mw, :]
        # ---- conv1 + bn1 + relu -> PF intermediate held in VMEM scratch ----
        acc = None
        for t, st in starts:
            d = jnp.dot(x_ref[0, st:st + mw, :], w1_ref[t],
                        preferred_element_type=jnp.float32)
            acc = d if acc is None else acc + d
        y1 = jnp.maximum(acc * s1_ref[...] + b1_ref[...], 0.0) * msk
        cmid = mid.shape[-1]
        mid[pl.ds(0, Wp + 1), :] = jnp.zeros((Wp + 1, cmid), mid.dtype)
        mid[pl.ds(Wp + 1, mw), :] = y1.astype(mid.dtype)
        mid[pl.ds(Wp + 1 + mw, LP - Wp - 1 - mw), :] = jnp.zeros(
            (LP - Wp - 1 - mw, cmid), mid.dtype)
        # ---- conv2 + bn2 + identity + relu -> PF output ----
        acc2 = None
        for t, st in starts:
            d = jnp.dot(mid[st:st + mw, :], w2_ref[t],
                        preferred_element_type=jnp.float32)
            acc2 = d if acc2 is None else acc2 + d
        y2 = acc2 * s2_ref[...] + b2_ref[...]
        if has_ds:
            idn = jnp.dot(x_ref[0, Wp + 1:Wp + 1 + mw, :], wd_ref[0],
                          preferred_element_type=jnp.float32)
            idn = idn * sd_ref[...] + bd_ref[...]
        else:
            idn = x_ref[0, Wp + 1:Wp + 1 + mw, :].astype(jnp.float32)
        y2 = jnp.maximum(y2 + idn, 0.0) * msk
        c = o_ref.shape[-1]
        o_ref[0, pl.ds(0, Wp + 1), :] = jnp.zeros((Wp + 1, c), o_ref.dtype)
        o_ref[0, pl.ds(Wp + 1, mw), :] = y2.astype(o_ref.dtype)
        o_ref[0, pl.ds(Wp + 1 + mw, LP - Wp - 1 - mw), :] = jnp.zeros(
            (LP - Wp - 1 - mw, c), o_ref.dtype)
    return kernel


def _fused_block_vmem_bytes(LP, cin_p, cmid, cout_p, has_ds):
    act = 2 * (LP * cin_p * 2) + 2 * (LP * cout_p * 2)   # double-buffered in/out
    scratch = LP * cmid * 2
    wts = 2 * 2 * (9 * cin_p * cmid + 9 * cmid * cout_p
                   + (cin_p * cout_p if has_ds else 0))
    misc = LP * 4 + 8 * (cmid + cout_p) * 4
    return act + scratch + wts + misc


def fused_basic_block_pf(x_pf, H, W, p):
    N, LP, cin_p = x_pf.shape
    Wp, LP2 = pf_dims(H, W)
    assert LP == LP2
    mw = H * Wp
    w1, (s1, b1) = p["conv1"], p["bn1"]
    w2, (s2, b2) = p["conv2"], p["bn2"]
    cmid = w1.shape[-1]
    cout_p = w2.shape[-1]
    has_ds = p["ds_conv"] is not None
    mask = pf_mask(H, W)

    args = [x_pf, w1, s1, b1, w2, s2, b2, mask]
    in_specs = [
        pl.BlockSpec((1, LP, cin_p), lambda n: (n, 0, 0)),
        pl.BlockSpec((9, cin_p, cmid), lambda n: (0, 0, 0)),
        pl.BlockSpec((1, cmid), lambda n: (0, 0)),
        pl.BlockSpec((1, cmid), lambda n: (0, 0)),
        pl.BlockSpec((9, cmid, cout_p), lambda n: (0, 0, 0)),
        pl.BlockSpec((1, cout_p), lambda n: (0, 0)),
        pl.BlockSpec((1, cout_p), lambda n: (0, 0)),
        pl.BlockSpec((LP, 1), lambda n: (0, 0)),
    ]
    if has_ds:
        wd, (sd, bd) = p["ds_conv"], p["ds_bn"]
        args += [wd, sd, bd]
        in_specs += [
            pl.BlockSpec((1, cin_p, cout_p), lambda n: (0, 0, 0)),
            pl.BlockSpec((1, cout_p), lambda n: (0, 0)),
            pl.BlockSpec((1, cout_p), lambda n: (0, 0)),
        ]

    return pl.pallas_call(
        _make_basic_block_kernel(Wp, mw, LP, has_ds),
        out_shape=jax.ShapeDtypeStruct((N, LP, cout_p), jnp.bfloat16),
        grid_spec=pltpu.PrefetchScalarGridSpec(
            num_scalar_prefetch=0, grid=(N,),
            in_specs=in_specs,
            out_specs=pl.BlockSpec((1, LP, cout_p), lambda n: (n, 0, 0)),
            scratch_shapes=[pltpu.VMEM((LP, cmid), jnp.bfloat16)],
        ),
        compiler_params=pltpu.CompilerParams(
            dimension_semantics=("parallel",),
            vmem_limit_bytes=VMEM_LIMIT),
    )(*args)


# ----------------------------------------------------------------------------
# Fused global-avgpool + Linear head (PF pad rows are zero, so a row-sum is exact).
# ----------------------------------------------------------------------------
def _head_kernel(inv_hw, x_ref, w_ref, b_ref, o_ref):
    pooled = jnp.sum(x_ref[...].astype(jnp.float32), axis=1) * inv_hw
    o_ref[...] = jnp.dot(pooled, w_ref[...],
                         preferred_element_type=jnp.float32) + b_ref[...]


def head_pf(x_pf, H, W, fc_w, fc_b, num_classes):
    N, LP, C = x_pf.shape
    ncp = fc_w.shape[1]
    out = pl.pallas_call(
        functools.partial(_head_kernel, 1.0 / float(H * W)),
        out_shape=jax.ShapeDtypeStruct((N, ncp), jnp.float32),
    )(x_pf, fc_w, fc_b)
    return out[:, :num_classes]


# ----------------------------------------------------------------------------
# Parameter construction (mirrors PyTorch __init__; channels pre-padded).
# ----------------------------------------------------------------------------
def init_conv(key, kh, kw, cin, cout):
    std = math.sqrt(2.0 / (cout * kh * kw))        # kaiming_normal_(fan_out, relu)
    w = std * jax.random.normal(key, (kh, kw, cin, cout), jnp.float32)
    cin_p, cout_p = _ceil_to(cin, LANE), _ceil_to(cout, LANE)
    w = jnp.pad(w, ((0, 0), (0, 0), (0, cin_p - cin), (0, cout_p - cout)))
    return w.reshape(kh * kw, cin_p, cout_p).astype(jnp.bfloat16)


def init_stem_conv(key, kh, kw, cin, cout):
    std = math.sqrt(2.0 / (cout * kh * kw))
    w = std * jax.random.normal(key, (kh, kw, cin, cout), jnp.float32)
    k = kh * kw * cin
    w = w.reshape(k, cout)
    w = jnp.pad(w, ((0, _ceil_to(k, LANE) - k), (0, _ceil_to(cout, LANE) - cout)))
    return w.astype(jnp.bfloat16)


def init_bn(c):
    # Inference-mode folded BN with default stats (gamma=1, beta=0, mean=0, var=1).
    eps = 1e-5
    cp = _ceil_to(c, LANE)
    gamma = jnp.ones((c,), jnp.float32)
    beta = jnp.zeros((c,), jnp.float32)
    mean = jnp.zeros((c,), jnp.float32)
    var = jnp.ones((c,), jnp.float32)
    scale = gamma / jnp.sqrt(var + eps)
    bias = beta - mean * scale
    scale = jnp.pad(scale, (0, cp - c)).reshape(1, cp)
    bias = jnp.pad(bias, (0, cp - c)).reshape(1, cp)
    return scale, bias


def build_resnet_params(key, block, layers, num_classes=10):
    assert block in ("basic", "bottleneck")
    expansion = 1 if block == "basic" else 4
    keys = iter(jax.random.split(key, 512))
    params = {"block": block, "num_classes": num_classes}
    params["conv1"] = init_stem_conv(next(keys), 7, 7, 3, 64)
    params["bn1"] = init_bn(64)
    inplanes = 64

    def make_layer(planes, blocks, stride):
        nonlocal inplanes
        blk_params = []
        for b in range(blocks):
            s = stride if b == 0 else 1
            need_ds = (b == 0) and (s != 1 or inplanes != planes * expansion)
            bp = {"stride": s}
            if block == "basic":
                bp["conv1"] = init_conv(next(keys), 3, 3, inplanes, planes)
                bp["bn1"] = init_bn(planes)
                bp["conv2"] = init_conv(next(keys), 3, 3, planes, planes)
                bp["bn2"] = init_bn(planes)
            else:
                width = planes  # base_width=64, groups=1
                bp["conv1"] = init_conv(next(keys), 1, 1, inplanes, width)
                bp["bn1"] = init_bn(width)
                bp["conv2"] = init_conv(next(keys), 3, 3, width, width)
                bp["bn2"] = init_bn(width)
                bp["conv3"] = init_conv(next(keys), 1, 1, width, planes * expansion)
                bp["bn3"] = init_bn(planes * expansion)
            if need_ds:
                bp["ds_conv"] = init_conv(next(keys), 1, 1, inplanes, planes * expansion)
                bp["ds_bn"] = init_bn(planes * expansion)
            else:
                bp["ds_conv"] = None
                bp["ds_bn"] = None
            blk_params.append(bp)
            inplanes = planes * expansion
        return blk_params

    params["layer1"] = make_layer(64, layers[0], 1)
    params["layer2"] = make_layer(128, layers[1], 2)
    params["layer3"] = make_layer(256, layers[2], 2)
    params["layer4"] = make_layer(512, layers[3], 1)   # spec: layer4 stride=1

    fan_in = 512 * expansion
    k = 1.0 / math.sqrt(fan_in)
    fc_w = jax.random.uniform(next(keys), (fan_in, num_classes), jnp.float32, -k, k)
    fc_b = jax.random.uniform(next(keys), (num_classes,), jnp.float32, -k, k)
    fin_p = _ceil_to(fan_in, LANE)
    nc_p = _ceil_to(num_classes, LANE)
    params["fc_w"] = jnp.pad(fc_w, ((0, fin_p - fan_in), (0, nc_p - num_classes)))
    params["fc_b"] = jnp.pad(fc_b, (0, nc_p - num_classes)).reshape(1, nc_p)
    return params


# ----------------------------------------------------------------------------
# Forward pass
# ----------------------------------------------------------------------------
def basic_block_forward(x_pf, H, W, p):
    s = p["stride"]
    N, LP, cin_p = x_pf.shape
    if s == 1:
        cmid = p["conv1"].shape[-1]
        cout_p = p["conv2"].shape[-1]
        need = _fused_block_vmem_bytes(LP, cin_p, cmid, cout_p,
                                       p["ds_conv"] is not None)
        if need <= int(VMEM_LIMIT * 0.85):
            return fused_basic_block_pf(x_pf, H, W, p), H, W
        # Fallback: per-conv PF kernels (still zero XLA glue between them).
        if p["ds_conv"] is not None:
            identity = conv_pf(x_pf, H, W, p["ds_conv"], p["ds_bn"], relu=False)
        else:
            identity = x_pf
        out = conv_pf(x_pf, H, W, p["conv1"], p["bn1"], relu=True)
        out = conv_pf(out, H, W, p["conv2"], p["bn2"], relu=True,
                      residual=identity)
        return out, H, W
    # stride-2 block: phase-split once (shared by conv1 and the downsample).
    x_ph, _, Wpp = phase_split_s2(x_pf, H, W)
    out, Ho, Wo = conv_s2(x_ph, Wpp, H, W, p["conv1"], p["bn1"], relu=True)
    identity, _, _ = conv_s2(x_ph, Wpp, H, W, p["ds_conv"], p["ds_bn"], relu=False)
    out = conv_pf(out, Ho, Wo, p["conv2"], p["bn2"], relu=True, residual=identity)
    return out, Ho, Wo


def bottleneck_block_forward(x_pf, H, W, p):
    s = p["stride"]
    out = conv_pf(x_pf, H, W, p["conv1"], p["bn1"], relu=True)
    if s == 1:
        out = conv_pf(out, H, W, p["conv2"], p["bn2"], relu=True)
        Ho, Wo = H, W
        if p["ds_conv"] is not None:
            identity = conv_pf(x_pf, H, W, p["ds_conv"], p["ds_bn"], relu=False)
        else:
            identity = x_pf
    else:
        mid_ph, _, Wpp = phase_split_s2(out, H, W)
        out, Ho, Wo = conv_s2(mid_ph, Wpp, H, W, p["conv2"], p["bn2"], relu=True)
        x_ph, _, Wpp2 = phase_split_s2(x_pf, H, W)
        identity, _, _ = conv_s2(x_ph, Wpp2, H, W, p["ds_conv"], p["ds_bn"],
                                 relu=False)
    out = conv_pf(out, Ho, Wo, p["conv3"], p["bn3"], relu=True, residual=identity)
    return out, Ho, Wo


def resnet_forward(params, x_nchw):
    x = jnp.transpose(x_nchw, (0, 2, 3, 1))             # NCHW -> NHWC (3 channels)
    N, H, W, _ = x.shape
    x_pf = stem_conv_pf(x, params["conv1"], params["bn1"])
    x_pf = maxpool3x3_s1_pf(x_pf, H, W)
    blk_fn = (basic_block_forward if params["block"] == "basic"
              else bottleneck_block_forward)
    for lname in ("layer1", "layer2", "layer3", "layer4"):
        for bp in params[lname]:
            x_pf, H, W = blk_fn(x_pf, H, W, bp)
    return head_pf(x_pf, H, W, params["fc_w"], params["fc_b"],
                   params["num_classes"])


# ----------------------------------------------------------------------------
# Main
# ----------------------------------------------------------------------------
if __name__ == "__main__":
    key = jax.random.PRNGKey(0)
    kp, kx = jax.random.split(key)

    # ResNet(BasicBlock, [1, 1, 1, 1]) with a small classification head.
    params = build_resnet_params(kp, block="basic", layers=[1, 1, 1, 1],
                                 num_classes=10)

    # PyTorch-convention NCHW input: (batch=2, channels=3, H=16, W=16)
    x = jax.random.normal(kx, (2, 3, 16, 16), jnp.float32)

    out = resnet_forward(params, x)
    out = jax.block_until_ready(out)
    assert out.shape == (2, 10), out.shape
    assert bool(jnp.all(jnp.isfinite(out)))
    print("KERNEL_OK")
</pallas_src>

<mosaic_0001>
module attributes {stable_mosaic.version = 11 : i64} {
  func.func @_stem_kernel(%arg0: i32, %arg1: memref<1x342x256xbf16, #tpu.memory_space<vmem>>, %arg2: memref<256x128xbf16, #tpu.memory_space<vmem>>, %arg3: memref<1x128xf32, #tpu.memory_space<vmem>>, %arg4: memref<1x128xf32, #tpu.memory_space<vmem>>, %arg5: memref<342x1xf32, #tpu.memory_space<vmem>>, %arg6: memref<1x342x128xbf16, #tpu.memory_space<vmem>>) attributes {dimension_semantics = [#tpu.dimension_semantics<parallel>], iteration_bounds = array<i64: 2>, scalar_prefetch = 0 : i64, scratch_operands = 0 : i64, tpu.core_type = #tpu.core_type<tc>, window_params = [{transform_indices = @transform_0, window_bounds = array<i64: 1, 342, 256>}, {pipeline_mode = #tpu.pipeline_mode<synchronous>, transform_indices = @transform_1, window_bounds = array<i64: 256, 128>}, {pipeline_mode = #tpu.pipeline_mode<synchronous>, transform_indices = @transform_2, window_bounds = array<i64: 1, 128>}, {pipeline_mode = #tpu.pipeline_mode<synchronous>, transform_indices = @transform_3, window_bounds = array<i64: 1, 128>}, {pipeline_mode = #tpu.pipeline_mode<synchronous>, transform_indices = @transform_4, window_bounds = array<i64: 342, 1>}, {transform_indices = @transform_5, window_bounds = array<i64: 1, 342, 128>}]} {
    %c0 = arith.constant 0 : index
    %c0_0 = arith.constant 0 : index
    %c0_1 = arith.constant 0 : index
    %0 = vector.load %arg1[%c0, %c0_0, %c0_1] : memref<1x342x256xbf16, #tpu.memory_space<vmem>>, vector<1x342x256xbf16>
    %1 = vector.shape_cast %0 : vector<1x342x256xbf16> to vector<342x256xbf16>
    %c0_2 = arith.constant 0 : index
    %c0_3 = arith.constant 0 : index
    %2 = vector.load %arg2[%c0_2, %c0_3] : memref<256x128xbf16, #tpu.memory_space<vmem>>, vector<256x128xbf16>
    %cst = arith.constant dense<0.000000e+00> : vector<342x128xf32>
    %3 = tpu.matmul %1, %2, %cst {dimension_numbers = #tpu.dot_dimension_numbers<[1], [0], [0], [1], [0, 0, 1, 1], [], []>} : vector<342x256xbf16>, vector<256x128xbf16>, vector<342x128xf32> -> vector<342x128xf32>
    %c0_4 = arith.constant 0 : index
    %c0_5 = arith.constant 0 : index
    %4 = vector.load %arg3[%c0_4, %c0_5] : memref<1x128xf32, #tpu.memory_space<vmem>>, vector<1x128xf32>
    %5 = vector.broadcast %4 : vector<1x128xf32> to vector<342x128xf32>
    %6 = arith.mulf %3, %5 : vector<342x128xf32>
    %c0_6 = arith.constant 0 : index
    %c0_7 = arith.constant 0 : index
    %7 = vector.load %arg4[%c0_6, %c0_7] : memref<1x128xf32, #tpu.memory_space<vmem>>, vector<1x128xf32>
    %8 = vector.broadcast %7 : vector<1x128xf32> to vector<342x128xf32>
    %9 = arith.addf %6, %8 : vector<342x128xf32>
    %cst_8 = arith.constant 0.000000e+00 : f32
    %10 = vector.broadcast %cst_8 : f32 to vector<342x128xf32>
    %11 = arith.maximumf %9, %10 : vector<342x128xf32>
    %c0_9 = arith.constant 0 : index
    %c0_10 = arith.constant 0 : index
    %12 = vector.load %arg5[%c0_9, %c0_10] : memref<342x1xf32, #tpu.memory_space<vmem>>, vector<342x1xf32>
    %13 = vector.broadcast %12 : vector<342x1xf32> to vector<342x128xf32>
    %14 = arith.mulf %11, %13 : vector<342x128xf32>
    %15 = arith.truncf %14 : vector<342x128xf32> to vector<342x128xbf16>
    %c0_11 = arith.constant 0 : index
    %c0_12 = arith.constant 0 : index
    %c0_13 = arith.constant 0 : index
    %16 = vector.load %arg6[%c0_11, %c0_12, %c0_13] : memref<1x342x128xbf16, #tpu.memory_space<vmem>>, vector<1x342x128xbf16>
    %17 = vector.shape_cast %16 : vector<1x342x128xbf16> to vector<342x128xbf16>
    %18 = vector.shape_cast %15 : vector<342x128xbf16> to vector<1x342x128xbf16>
    tpu.vector_store %arg6[%c0_11, %c0_12, %c0_13], %18 {strides = array<i32>} : memref<1x342x128xbf16, #tpu.memory_space<vmem>>, vector<1x342x128xbf16>,
    return
  }
  func.func @transform_0(%arg0: i32) -> (i32, i32, i32) {
    %c0_i32 = arith.constant 0 : i32
    %c0_i32_0 = arith.constant 0 : i32
    %c0_i32_1 = arith.constant 0 : i32
    return %arg0, %c0_i32, %c0_i32_0 : i32, i32, i32
  }
  func.func @transform_1(%arg0: i32) -> (i32, i32) {
    %c0_i32 = arith.constant 0 : i32
    %c0_i32_0 = arith.constant 0 : i32
    %c0_i32_1 = arith.constant 0 : i32
    return %c0_i32, %c0_i32_0 : i32, i32
  }
  func.func @transform_2(%arg0: i32) -> (i32, i32) {
    %c0_i32 = arith.constant 0 : i32
    %c0_i32_0 = arith.constant 0 : i32
    %c0_i32_1 = arith.constant 0 : i32
    return %c0_i32, %c0_i32_0 : i32, i32
  }
  func.func @transform_3(%arg0: i32) -> (i32, i32) {
    %c0_i32 = arith.constant 0 : i32
    %c0_i32_0 = arith.constant 0 : i32
    %c0_i32_1 = arith.constant 0 : i32
    return %c0_i32, %c0_i32_0 : i32, i32
  }
  func.func @transform_4(%arg0: i32) -> (i32, i32) {
    %c0_i32 = arith.constant 0 : i32
    %c0_i32_0 = arith.constant 0 : i32
    %c0_i32_1 = arith.constant 0 : i32
    return %c0_i32, %c0_i32_0 : i32, i32
  }
  func.func @transform_5(%arg0: i32) -> (i32, i32, i32) {
    %c0_i32 = arith.constant 0 : i32
    %c0_i32_0 = arith.constant 0 : i32
    %c0_i32_1 = arith.constant 0 : i32
    return %arg0, %c0_i32, %c0_i32_0 : i32, i32, i32
  }
}

</mosaic_0001>

<llo_original>
// kernel: tpu_custom_call.1
$region0: #{tpu_custom_call.1}
  #allocation0 [shape = 'u32[]', space=smem, size = 0x4, offset = 0x4, fixed_abs, tag = 'smem constant byte address 0x4 - core index']
  #allocation1 [shape = 'u32[144,128]{1,0:T(1,128)}', space=vmem, size = 0x12000, scoped, tag = 'internal scratch']
  %s0 = inlined_call_operand.hbm [shape: bf16[2,342,256], index: 0, kind: input, shape index: {}]
  %s1 = inlined_call_operand.hbm [shape: bf16[256,128], index: 1, kind: input, shape index: {}]
  %s2 = inlined_call_operand.hbm [shape: f32[1,128], index: 2, kind: input, shape index: {}]
  %s3 = inlined_call_operand.hbm [shape: f32[1,128], index: 3, kind: input, shape index: {}]
  %s4 = inlined_call_operand.hbm [shape: f32[342,1], index: 4, kind: input, shape index: {}]
  %s5 = inlined_call_operand.hbm [shape: bf16[2,342,128], index: 5, kind: output, shape index: {}]
  %s6 = sld [smem:[#allocation0]]
  $region73: #{tpu_custom_call.1} parent=0
    _
  %s8 = ssub.s32 1, %s6
  %s9 = scalar_select 0, %s8, %s6
  $region1: #{tpu_custom_call.1} parent=0
    #allocation2 [shape = 'u8[352256]{0}', space=vmem, size = 0x56000, scoped, tag = 'input window, operand 0']
    #allocation3 [shape = 's32[2]{0}', space=sflag, size = 0x8, scoped, tag = 'scoped memory for tpu_custom_call.1']
    #allocation4 [shape = 's32[2]{0}', space=sflag, size = 0x8, scoped, tag = 'scoped memory for tpu_custom_call.1']
    #allocation5 [shape = 'u8[65536]{0}', space=vmem, size = 0x10000, scoped, tag = 'input window, operand 1, single buffered']
    #allocation6 [shape = 's32[1]{0}', space=sflag, size = 0x4, scoped, tag = 'scoped memory for tpu_custom_call.1']
    #allocation7 [shape = 'u8[512]{0}', space=vmem, size = 0x400, scoped, tag = 'input window, operand 2, single buffered']
    #allocation8 [shape = 'u8[512]{0}', space=vmem, size = 0x400, scoped, tag = 'input window, operand 3, single buffered']
    #allocation9 [shape = 's32[1]{0}', space=sflag, size = 0x4, scoped, tag = 'scoped memory for tpu_custom_call.1']
    #allocation10 [shape = 'u8[176128]{0}', space=vmem, size = 0x2b000, scoped, tag = 'input window, operand 4, single buffered']
    #allocation11 [shape = 'u8[176128]{0}', space=vmem, size = 0x2b000, scoped, tag = 'output window, operand 0']
    %10 = vsyncpa [#allocation3], 0
    %s11 = scalar_lea.sflag [#allocation3], 1
    %12 = vsyncpa %s11, 0
    %13 = vsyncpa [#allocation6], 0
    %14 = vsyncpa [#allocation9], 0
    %15 = vsyncpa [#allocation4], 0
    %s16 = scalar_lea.sflag [#allocation4], 1
    %17 = vsyncpa %s16, 0
    loop: start=0, step=1, limit=4
    $region2: #{tpu_custom_call.1} parent=1 // loop_pre_header
      _
    $region3: #{tpu_custom_call.1} parent=1 // loop_header
      %s19 = sphi 0, %s23
      %p20 = scmp.ge.s32.totalorder %s19, 4
      %s29 = sphi 0, %s31
      %s32 = sphi 0, %s29
      %s33 = sphi 0, %s32
      %s49 = sphi 0, %s33
      %s53 = sphi 0, %s53
      %s55 = sphi 0, %s53
      %s56 = sphi 0, %s55
      %s70 = sphi 0, %s56
      %s74 = sphi 0, %s74
      %s76 = sphi 0, %s74
      %s77 = sphi 0, %s76
      %s91 = sphi 0, %s77
      %s95 = sphi 0, %s95
      %s97 = sphi 0, %s95
      %s98 = sphi 0, %s97
      %s112 = sphi 0, %s98
      %s116 = sphi 0, %s116
      %s118 = sphi 0, %s116
      %s119 = sphi 0, %s118
      %s133 = sphi 0, %s119
      %s139 = sphi 0, %s141
      %s142 = sphi 0, %s139
      %s143 = sphi 0, %s142
      %s159 = sphi 0, %s143
    $region4: #{tpu_custom_call.1} parent=1 // loop_header_branch
      %22 = sbr.rel (%p20) target = $region8
    $region5: #{tpu_custom_call.1} parent=1 // loop_body
      %s24 = ssub.s32 %s19, 1
      %s25 = ssub.s32 %s19, 2
      %s26 = sadd.s32 %s19, 1
      %s27 = ssub.s32 %s19, %s26
      %p28 = scmp.eq.s32.totalorder %s27, 0
      %s30 = sadd.s32 %s29, 1
      %s31 = scalar_select %p28, %s29, %s30
      %p34 = pneg %p28
      %p35 = scmp.eq.s32.totalorder %s19, 1
      %p36 = por %p34, %p35
      %p37 = scmp.ne.s32.totalorder %s29, %s32
      %p38 = scmp.eq.s32.totalorder %s19, 0
      %p39 = por %p37, %p38
      %p40 = scmp.ne.s32.totalorder %s29, %s32
      %p41 = scmp.eq.s32.totalorder %s24, 1
      %p42 = por %p40, %p41
      %p43 = scmp.ne.s32.totalorder %s32, %s33
      %p44 = scmp.eq.s32.totalorder %s24, 0
      %p45 = por %p43, %p44
      %p46 = scmp.ne.s32.totalorder %s32, %s33
      %p47 = scmp.eq.s32.totalorder %s25, 1
      %p48 = por %p46, %p47
      %p50 = scmp.ne.s32.totalorder %s33, %s49
      %p51 = scmp.eq.s32.totalorder %s25, 0
      %p52 = por %p50, %p51
      %s54 = sadd.s32 %s53, 1
      %p57 = scmp.eq.s32.totalorder %s19, 1
      %p58 = scmp.ne.s32.totalorder %s53, %s55
      %p59 = scmp.eq.s32.totalorder %s19, 0
      %p60 = por %p58, %p59
      %p61 = scmp.ne.s32.totalorder %s53, %s55
      %p62 = scmp.eq.s32.totalorder %s24, 1
      %p63 = por %p61, %p62
      %p64 = scmp.ne.s32.totalorder %s55, %s56
      %p65 = scmp.eq.s32.totalorder %s24, 0
      %p66 = por %p64, %p65
      %p67 = scmp.ne.s32.totalorder %s55, %s56
      %p68 = scmp.eq.s32.totalorder %s25, 1
      %p69 = por %p67, %p68
      %p71 = scmp.ne.s32.totalorder %s56, %s70
      %p72 = scmp.eq.s32.totalorder %s25, 0
      %p73 = por %p71, %p72
      %s75 = sadd.s32 %s74, 1
      %p78 = scmp.eq.s32.totalorder %s19, 1
      %p79 = scmp.ne.s32.totalorder %s74, %s76
      %p80 = scmp.eq.s32.totalorder %s19, 0
      %p81 = por %p79, %p80
      %p82 = scmp.ne.s32.totalorder %s74, %s76
      %p83 = scmp.eq.s32.totalorder %s24, 1
      %p84 = por %p82, %p83
      %p85 = scmp.ne.s32.totalorder %s76, %s77
      %p86 = scmp.eq.s32.totalorder %s24, 0
      %p87 = por %p85, %p86
      %p88 = scmp.ne.s32.totalorder %s76, %s77
      %p89 = scmp.eq.s32.totalorder %s25, 1
      %p90 = por %p88, %p89
      %p92 = scmp.ne.s32.totalorder %s77, %s91
      %p93 = scmp.eq.s32.totalorder %s25, 0
      %p94 = por %p92, %p93
      %s96 = sadd.s32 %s95, 1
      %p99 = scmp.eq.s32.totalorder %s19, 1
      %p100 = scmp.ne.s32.totalorder %s95, %s97
      %p101 = scmp.eq.s32.totalorder %s19, 0
      %p102 = por %p100, %p101
      %p103 = scmp.ne.s32.totalorder %s95, %s97
      %p104 = scmp.eq.s32.totalorder %s24, 1
      %p105 = por %p103, %p104
      %p106 = scmp.ne.s32.totalorder %s97, %s98
      %p107 = scmp.eq.s32.totalorder %s24, 0
      %p108 = por %p106, %p107
      %p109 = scmp.ne.s32.totalorder %s97, %s98
      %p110 = scmp.eq.s32.totalorder %s25, 1
      %p111 = por %p109, %p110
      %p113 = scmp.ne.s32.totalorder %s98, %s112
      %p114 = scmp.eq.s32.totalorder %s25, 0
      %p115 = por %p113, %p114
      %s117 = sadd.s32 %s116, 1
      %p120 = scmp.eq.s32.totalorder %s19, 1
      %p121 = scmp.ne.s32.totalorder %s116, %s118
      %p122 = scmp.eq.s32.totalorder %s19, 0
      %p123 = por %p121, %p122
      %p124 = scmp.ne.s32.totalorder %s116, %s118
      %p125 = scmp.eq.s32.totalorder %s24, 1
      %p126 = por %p124, %p125
      %p127 = scmp.ne.s32.totalorder %s118, %s119
      %p128 = scmp.eq.s32.totalorder %s24, 0
      %p129 = por %p127, %p128
      %p130 = scmp.ne.s32.totalorder %s118, %s119
      %p131 = scmp.eq.s32.totalorder %s25, 1
      %p132 = por %p130, %p131
      %p134 = scmp.ne.s32.totalorder %s119, %s133
      %p135 = scmp.eq.s32.totalorder %s25, 0
      %p136 = por %p134, %p135
      %s137 = ssub.s32 %s19, %s26
      %p138 = scmp.eq.s32.totalorder %s137, 0
      %s140 = sadd.s32 %s139, 1
      %s141 = scalar_select %p138, %s139, %s140
      %p144 = pneg %p138
      %p145 = scmp.eq.s32.totalorder %s19, 1
      %p146 = por %p144, %p145
      %p147 = scmp.ne.s32.totalorder %s139, %s142
      %p148 = scmp.eq.s32.totalorder %s19, 0
      %p149 = por %p147, %p148
      %p150 = scmp.ne.s32.totalorder %s139, %s142
      %p151 = scmp.eq.s32.totalorder %s24, 1
      %p152 = por %p150, %p151
      %p153 = scmp.ne.s32.totalorder %s142, %s143
      %p154 = scmp.eq.s32.totalorder %s24, 0
      %p155 = por %p153, %p154
      %p156 = scmp.ne.s32.totalorder %s142, %s143
      %p157 = scmp.eq.s32.totalorder %s25, 1
      %p158 = por %p156, %p157
      %p160 = scmp.ne.s32.totalorder %s143, %s159
      %p161 = scmp.eq.s32.totalorder %s25, 0
      %p162 = por %p160, %p161
      %p163 = scmp.le.s32.totalorder 1, %s19
      %p164 = scmp.lt.s32.totalorder %s19, 3
      %p165 = pnand %p163, %p164
      %p166 = pneg %p165
      // Predicated region
      $region9: #{tpu_custom_call.1} parent=5 // pred_check
        _
      $region10: #{tpu_custom_call.1} parent=5 // pred_check_branch
        %168 = sbr.rel (%p165) target = $region12
      $region11: #{tpu_custom_call.1} parent=5 // pred_region
        %s169 = ssub.s32 %s19, 1
        // Predicated region
        $region13: #{tpu_custom_call.1} parent=11 // pred_check
          %p170 = pneg %p66
        $region14: #{tpu_custom_call.1} parent=11 // pred_check_branch
          %172 = sbr.rel (%p170) target = $region16
        $region15: #{tpu_custom_call.1} parent=11 // pred_region
          %s174 = ssub.s32 2048, 2048
          %175 = vsyncadd [#allocation6], %s174
          %s176 = sshll.u32 [#allocation5], 4
          %s177 = int_to_ptr.vmem [resolvable:$true] %s176
          %182 = dma.hbm_to_vmem [thread:$0]  %s1, 2048, %s177, [#allocation6], 64, 64, 4
        $region16: #{tpu_custom_call.1} parent=11 // pred_fallthru
          _
        // Predicated region
        $region17: #{tpu_custom_call.1} parent=11 // pred_check
          %p183 = pneg %p87
        $region18: #{tpu_custom_call.1} parent=11 // pred_check_branch
          %185 = sbr.rel (%p183) target = $region20
        $region19: #{tpu_custom_call.1} parent=11 // pred_region
          %s187 = ssub.s32 16, 16
          %188 = vsyncadd [#allocation6], %s187
          %s190 = sshll.u32 [#allocation7], 4
          %s191 = int_to_ptr.vmem [resolvable:$true] %s190
          %193 = dma.hbm_to_vmem [thread:$0]  %s2, 16, %s191, [#allocation6]
        $region20: #{tpu_custom_call.1} parent=11 // pred_fallthru
          _
        // Predicated region
        $region21: #{tpu_custom_call.1} parent=11 // pred_check
          %p194 = pneg %p108
        $region22: #{tpu_custom_call.1} parent=11 // pred_check_branch
          %196 = sbr.rel (%p194) target = $region24
        $region23: #{tpu_custom_call.1} parent=11 // pred_region
          %s198 = ssub.s32 16, 16
          %199 = vsyncadd [#allocation9], %s198
          %s201 = sshll.u32 [#allocation8], 4
          %s202 = int_to_ptr.vmem [resolvable:$true] %s201
          %204 = dma.hbm_to_vmem [thread:$0]  %s3, 16, %s202, [#allocation9]
        $region24: #{tpu_custom_call.1} parent=11 // pred_fallthru
          _
        // Predicated region
        $region25: #{tpu_custom_call.1} parent=11 // pred_check
          %p205 = pneg %p129
        $region26: #{tpu_custom_call.1} parent=11 // pred_check_branch
          %207 = sbr.rel (%p205) target = $region28
        $region27: #{tpu_custom_call.1} parent=11 // pred_region
          %s209 = ssub.s32 5504, 5504
          %210 = vsyncadd [#allocation9], %s209
          %s211 = sshll.u32 [#allocation10], 4
          %s212 = int_to_ptr.vmem [resolvable:$true] %s211
          %217 = dma.hbm_to_vmem [thread:$0]  %s4, 5504, %s212, [#allocation9], 128, 128, 8
        $region28: #{tpu_custom_call.1} parent=11 // pred_fallthru
          _
      $region12: #{tpu_custom_call.1} parent=5 // pred_fallthru
        _
      %p218 = scmp.lt.s32.totalorder %s19, 2
      // Predicated region
      $region29: #{tpu_custom_call.1} parent=5 // pred_check
        %p219 = pneg %p218
      $region30: #{tpu_custom_call.1} parent=5 // pred_check_branch
        %221 = sbr.rel (%p219) target = $region32
      $region31: #{tpu_custom_call.1} parent=5 // pred_region
        // Predicated region
        $region33: #{tpu_custom_call.1} parent=31 // pred_check
          %p222 = pneg %p39
        $region34: #{tpu_custom_call.1} parent=31 // pred_check_branch
          %224 = sbr.rel (%p222) target = $region36
        $region35: #{tpu_custom_call.1} parent=31 // pred_region
          %s225 = sand.u32 %s29, 1
          %s226 = scalar_lea.sflag [#allocation3], %s225
          %s227 = sand.u32 %s29, 1
          %s228 = smul.addr %s227, 344
          %s229 = scalar_lea.vmem [#allocation2], %s228
          %s231 = ssub.s32 5504, 5504
          %232 = vsyncadd %s226, %s231
          %s233 = smul.addr %s19, 86
          %s234 = smul.addr %s233, 64
          %s235 = scalar_lea.hbm %s0, %s234
          %s236 = sshll.u32 %s229, 4
          %s237 = int_to_ptr.vmem [resolvable:$true] %s236
          %242 = dma.hbm_to_vmem [thread:$0]  %s235, 5504, %s237, %s226, 128, 128, 8
        $region36: #{tpu_custom_call.1} parent=31 // pred_fallthru
          _
      $region32: #{tpu_custom_call.1} parent=5 // pred_fallthru
        _
      %p243 = scmp.le.s32.totalorder 1, %s19
      %p244 = scmp.lt.s32.totalorder %s19, 3
      %p245 = pnand %p243, %p244
      %p246 = pneg %p245
      // Predicated region
      $region37: #{tpu_custom_call.1} parent=5 // pred_check
        _
      $region38: #{tpu_custom_call.1} parent=5 // pred_check_branch
        %248 = sbr.rel (%p245) target = $region40
      $region39: #{tpu_custom_call.1} parent=5 // pred_region
        %s249 = ssub.s32 %s19, 1
        %s250 = sand.u32 %s32, 1
        %s251 = scalar_lea.sflag [#allocation3], %s250
        %s252 = sand.u32 %s32, 1
        %s253 = smul.addr %s252, 344
        %s254 = scalar_lea.vmem [#allocation2], %s253
        // Predicated region
        $region41: #{tpu_custom_call.1} parent=39 // pred_check
          %p255 = pneg %p45
        $region42: #{tpu_custom_call.1} parent=39 // pred_check_branch
          %257 = sbr.rel (%p255) target = $region44
        $region43: #{tpu_custom_call.1} parent=39 // pred_region
          %258 = dma.done %s251, 5504
        $region44: #{tpu_custom_call.1} parent=39 // pred_fallthru
          _
        // Predicated region
        $region45: #{tpu_custom_call.1} parent=39 // pred_check
          %p259 = pneg %p66
        $region46: #{tpu_custom_call.1} parent=39 // pred_check_branch
          %261 = sbr.rel (%p259) target = $region48
        $region47: #{tpu_custom_call.1} parent=39 // pred_region
          %262 = dma.done [#allocation6], 2048
        $region48: #{tpu_custom_call.1} parent=39 // pred_fallthru
          _
        // Predicated region
        $region49: #{tpu_custom_call.1} parent=39 // pred_check
          %p263 = pneg %p87
        $region50: #{tpu_custom_call.1} parent=39 // pred_check_branch
          %265 = sbr.rel (%p263) target = $region52
        $region51: #{tpu_custom_call.1} parent=39 // pred_region
          %266 = dma.done [#allocation6], 16
        $region52: #{tpu_custom_call.1} parent=39 // pred_fallthru
          _
        // Predicated region
        $region53: #{tpu_custom_call.1} parent=39 // pred_check
          %p267 = pneg %p108
        $region54: #{tpu_custom_call.1} parent=39 // pred_check_branch
          %269 = sbr.rel (%p267) target = $region56
        $region55: #{tpu_custom_call.1} parent=39 // pred_region
          %270 = dma.done [#allocation9], 16
        $region56: #{tpu_custom_call.1} parent=39 // pred_fallthru
          _
        // Predicated region
        $region57: #{tpu_custom_call.1} parent=39 // pred_check
          %p271 = pneg %p129
        $region58: #{tpu_custom_call.1} parent=39 // pred_check_branch
          %273 = sbr.rel (%p271) target = $region60
        $region59: #{tpu_custom_call.1} parent=39 // pred_region
          %274 = dma.done [#allocation9], 5504
        $region60: #{tpu_custom_call.1} parent=39 // pred_fallthru
          _
        %s275 = sand.u32 %s32, 1
        %s276 = scalar_lea.sflag [#allocation3], %s275
        %s277 = sand.u32 %s32, 1
        %s278 = smul.addr %s277, 344
        %s279 = scalar_lea.vmem [#allocation2], %s278
        %p280 = pneg %p45
        %p281 = pneg %p42
        %p282 = pneg %p66
        %p283 = pneg %p63
        %p284 = pneg %p87
        %p285 = pneg %p84
        %p286 = pneg %p108
        %p287 = pneg %p105
        %p288 = pneg %p129
        %p289 = pneg %p126
        %p290 = pneg %p155
        %p291 = pneg %p152
        %s292 = sand.u32 %s142, 1
        %s293 = scalar_lea.sflag [#allocation4], %s292
        %s294 = sand.u32 %s142, 1
        %s295 = smul.addr %s294, 172
        %s296 = scalar_lea.vmem [#allocation11], %s295
        %v298 = vld [vmem:[%s254] sm:$0xff]
        %v299 = vld [vmem:[%s254 + $0x8] sm:$0xff]
        %v300 = vld [vmem:[%s254 + $0x10] sm:$0xff]
        %v301 = vld [vmem:[%s254 + $0x18] sm:$0xff]
        %v302 = vld [vmem:[%s254 + $0x20] sm:$0xff]
        %v303 = vld [vmem:[%s254 + $0x28] sm:$0xff]
        %v304 = vld [vmem:[%s254 + $0x30] sm:$0xff]
        %v305 = vld [vmem:[%s254 + $0x38] sm:$0xff]
        %v306 = vld [vmem:[%s254 + $0x40] sm:$0xff]
        %v307 = vld [vmem:[%s254 + $0x48] sm:$0xff]
        %v308 = vld [vmem:[%s254 + $0x50] sm:$0xff]
        %v309 = vld [vmem:[%s254 + $0x58] sm:$0xff]
        %v310 = vld [vmem:[%s254 + $0x60] sm:$0xff]
        %v311 = vld [vmem:[%s254 + $0x68] sm:$0xff]
        %v312 = vld [vmem:[%s254 + $0x70] sm:$0xff]
        %v313 = vld [vmem:[%s254 + $0x78] sm:$0xff]
        %v314 = vld [vmem:[%s254 + $0x80] sm:$0xff]
        %v315 = vld [vmem:[%s254 + $0x88] sm:$0xff]
        %v316 = vld [vmem:[%s254 + $0x90] sm:$0xff]
        %v317 = vld [vmem:[%s254 + $0x98] sm:$0xff]
        %v318 = vld [vmem:[%s254 + $0xa0] sm:$0xff]
        %v319 = vld [vmem:[%s254 + $0xa8] sm:$0xff]
        %v320 = vld [vmem:[%s254 + $0xb0] sm:$0xff]
        %v321 = vld [vmem:[%s254 + $0xb8] sm:$0xff]
        %v322 = vld [vmem:[%s254 + $0xc0] sm:$0xff]
        %v323 = vld [vmem:[%s254 + $0xc8] sm:$0xff]
        %v324 = vld [vmem:[%s254 + $0xd0] sm:$0xff]
        %v325 = vld [vmem:[%s254 + $0xd8] sm:$0xff]
        %v326 = vld [vmem:[%s254 + $0xe0] sm:$0xff]
        %v327 = vld [vmem:[%s254 + $0xe8] sm:$0xff]
        %v328 = vld [vmem:[%s254 + $0xf0] sm:$0xff]
        %v329 = vld [vmem:[%s254 + $0xf8] sm:$0xff]
        %v330 = vld [vmem:[%s254 + $0x100] sm:$0xff]
        %v331 = vld [vmem:[%s254 + $0x108] sm:$0xff]
        %v332 = vld [vmem:[%s254 + $0x110] sm:$0xff]
        %v333 = vld [vmem:[%s254 + $0x118] sm:$0xff]
        %v334 = vld [vmem:[%s254 + $0x120] sm:$0xff]
        %v335 = vld [vmem:[%s254 + $0x128] sm:$0xff]
        %v336 = vld [vmem:[%s254 + $0x130] sm:$0xff]
        %v337 = vld [vmem:[%s254 + $0x138] sm:$0xff]
        %v338 = vld [vmem:[%s254 + $0x140] sm:$0xff]
        %v339 = vld [vmem:[%s254 + $0x148] sm:$0xff]
        %v340 = vld [vmem:[%s254 + $0x150] sm:$0x77]
        %v341 = vld [vmem:[#allocation5] sm:$0xf]
        %v342 = vld [vmem:[#allocation5 + $0x4] sm:$0xf]
        %v343 = vld [vmem:[#allocation5 + $0x8] sm:$0xf]
        %v344 = vld [vmem:[#allocation5 + $0xc] sm:$0xf]
        %v345 = vld [vmem:[#allocation5 + $0x10] sm:$0xf]
        %v346 = vld [vmem:[#allocation5 + $0x14] sm:$0xf]
        %v347 = vld [vmem:[#allocation5 + $0x18] sm:$0xf]
        %v348 = vld [vmem:[#allocation5 + $0x1c] sm:$0xf]
        %v349 = vld [vmem:[#allocation5 + $0x20] sm:$0xf]
        %v350 = vld [vmem:[#allocation5 + $0x24] sm:$0xf]
        %v351 = vld [vmem:[#allocation5 + $0x28] sm:$0xf]
        %v352 = vld [vmem:[#allocation5 + $0x2c] sm:$0xf]
        %v353 = vld [vmem:[#allocation5 + $0x30] sm:$0xf]
        %v354 = vld [vmem:[#allocation5 + $0x34] sm:$0xf]
        %v355 = vld [vmem:[#allocation5 + $0x38] sm:$0xf]
        %v356 = vld [vmem:[#allocation5 + $0x3c] sm:$0xf]
        %v357 = vld [vmem:[#allocation5 + $0x40] sm:$0xf]
        %v358 = vld [vmem:[#allocation5 + $0x44] sm:$0xf]
        %v359 = vld [vmem:[#allocation5 + $0x48] sm:$0xf]
        %v360 = vld [vmem:[#allocation5 + $0x4c] sm:$0xf]
        %v361 = vld [vmem:[#allocation5 + $0x50] sm:$0xf]
        %v362 = vld [vmem:[#allocation5 + $0x54] sm:$0xf]
        %v363 = vld [vmem:[#allocation5 + $0x58] sm:$0xf]
        %v364 = vld [vmem:[#allocation5 + $0x5c] sm:$0xf]
        %v365 = vld [vmem:[#allocation5 + $0x60] sm:$0xf]
        %v366 = vld [vmem:[#allocation5 + $0x64] sm:$0xf]
        %v367 = vld [vmem:[#allocation5 + $0x68] sm:$0xf]
        %v368 = vld [vmem:[#allocation5 + $0x6c] sm:$0xf]
        %v369 = vld [vmem:[#allocation5 + $0x70] sm:$0xf]
        %v370 = vld [vmem:[#allocation5 + $0x74] sm:$0xf]
        %v371 = vld [vmem:[#allocation5 + $0x78] sm:$0xf]
        %v372 = vld [vmem:[#allocation5 + $0x7c] sm:$0xf]
        %v416 = vunpack.c.l.b16 %v298
        %v417 = vunpack.c.h.b16 %v298
        %v418 = vunpack.c.l.b16 %v299
        %v419 = vunpack.c.h.b16 %v299
        %v420 = vunpack.c.l.b16 %v300
        %v421 = vunpack.c.h.b16 %v300
        %v422 = vunpack.c.l.b16 %v301
        %v423 = vunpack.c.h.b16 %v301
        %v424 = vunpack.c.l.b16 %v302
        %v425 = vunpack.c.h.b16 %v302
        %v426 = vunpack.c.l.b16 %v303
        %v427 = vunpack.c.h.b16 %v303
        %v428 = vunpack.c.l.b16 %v304
        %v429 = vunpack.c.h.b16 %v304
        %v430 = vunpack.c.l.b16 %v305
        %v431 = vunpack.c.h.b16 %v305
        %v432 = vunpack.c.l.b16 %v306
        %v433 = vunpack.c.h.b16 %v306
        %v434 = vunpack.c.l.b16 %v307
        %v435 = vunpack.c.h.b16 %v307
        %v436 = vunpack.c.l.b16 %v308
        %v437 = vunpack.c.h.b16 %v308
        %v438 = vunpack.c.l.b16 %v309
        %v439 = vunpack.c.h.b16 %v309
        %v440 = vunpack.c.l.b16 %v310
        %v441 = vunpack.c.h.b16 %v310
        %v442 = vunpack.c.l.b16 %v311
        %v443 = vunpack.c.h.b16 %v311
        %v444 = vunpack.c.l.b16 %v312
        %v445 = vunpack.c.h.b16 %v312
        %v446 = vunpack.c.l.b16 %v313
        %v447 = vunpack.c.h.b16 %v313
        %v448 = vunpack.c.l.b16 %v314
        %v449 = vunpack.c.h.b16 %v314
        %v450 = vunpack.c.l.b16 %v315
        %v451 = vunpack.c.h.b16 %v315
        %v452 = vunpack.c.l.b16 %v316
        %v453 = vunpack.c.h.b16 %v316
        %v454 = vunpack.c.l.b16 %v317
        %v455 = vunpack.c.h.b16 %v317
        %v456 = vunpack.c.l.b16 %v318
        %v457 = vunpack.c.h.b16 %v318
        %v458 = vunpack.c.l.b16 %v319
        %v459 = vunpack.c.h.b16 %v319
        %v460 = vunpack.c.l.b16 %v320
        %v461 = vunpack.c.h.b16 %v320
        %v462 = vunpack.c.l.b16 %v321
        %v463 = vunpack.c.h.b16 %v321
        %v464 = vunpack.c.l.b16 %v322
        %v465 = vunpack.c.h.b16 %v322
        %v466 = vunpack.c.l.b16 %v323
        %v467 = vunpack.c.h.b16 %v323
        %v468 = vunpack.c.l.b16 %v324
        %v469 = vunpack.c.h.b16 %v324
        %v470 = vunpack.c.l.b16 %v325
        %v471 = vunpack.c.h.b16 %v325
        %v472 = vunpack.c.l.b16 %v326
        %v473 = vunpack.c.h.b16 %v326
        %v474 = vunpack.c.l.b16 %v327
        %v475 = vunpack.c.h.b16 %v327
        %v476 = vunpack.c.l.b16 %v328
        %v477 = vunpack.c.h.b16 %v328
        %v478 = vunpack.c.l.b16 %v329
        %v479 = vunpack.c.h.b16 %v329
        %v480 = vunpack.c.l.b16 %v330
        %v481 = vunpack.c.h.b16 %v330
        %v482 = vunpack.c.l.b16 %v331
        %v483 = vunpack.c.h.b16 %v331
        %v484 = vunpack.c.l.b16 %v332
        %v485 = vunpack.c.h.b16 %v332
        %v486 = vunpack.c.l.b16 %v333
        %v487 = vunpack.c.h.b16 %v333
        %v488 = vunpack.c.l.b16 %v334
        %v489 = vunpack.c.h.b16 %v334
        %v490 = vunpack.c.l.b16 %v335
        %v491 = vunpack.c.h.b16 %v335
        %v492 = vunpack.c.l.b16 %v336
        %v493 = vunpack.c.h.b16 %v336
        %v494 = vunpack.c.l.b16 %v337
        %v495 = vunpack.c.h.b16 %v337
        %v496 = vunpack.c.l.b16 %v338
        %v497 = vunpack.c.h.b16 %v338
        %v498 = vunpack.c.l.b16 %v339
        %v499 = vunpack.c.h.b16 %v339
        %v500 = vunpack.c.l.b16 %v340
        %v501 = vunpack.c.h.b16 %v340
        %v502 = vpack.c.b16 %v418, %v416
        %v503 = vpack.c.b16 %v419, %v417
        %v504 = vpack.c.b16 %v422, %v420
        %v505 = vpack.c.b16 %v423, %v421
        %v506 = vpack.c.b16 %v426, %v424
        %v507 = vpack.c.b16 %v427, %v425
        %v508 = vpack.c.b16 %v430, %v428
        %v509 = vpack.c.b16 %v431, %v429
        %v510 = vpack.c.b16 %v434, %v432
        %v511 = vpack.c.b16 %v435, %v433
        %v512 = vpack.c.b16 %v438, %v436
        %v513 = vpack.c.b16 %v439, %v437
        %v514 = vpack.c.b16 %v442, %v440
        %v515 = vpack.c.b16 %v443, %v441
        %v516 = vpack.c.b16 %v446, %v444
        %v517 = vpack.c.b16 %v447, %v445
        %v518 = vpack.c.b16 %v450, %v448
        %v519 = vpack.c.b16 %v451, %v449
        %v520 = vpack.c.b16 %v454, %v452
        %v521 = vpack.c.b16 %v455, %v453
        %v522 = vpack.c.b16 %v458, %v456
        %v523 = vpack.c.b16 %v459, %v457
        %v524 = vpack.c.b16 %v462, %v460
        %v525 = vpack.c.b16 %v463, %v461
        %v526 = vpack.c.b16 %v466, %v464
        %v527 = vpack.c.b16 %v467, %v465
        %v528 = vpack.c.b16 %v470, %v468
        %v529 = vpack.c.b16 %v471, %v469
        %v530 = vpack.c.b16 %v474, %v472
        %v531 = vpack.c.b16 %v475, %v473
        %v532 = vpack.c.b16 %v478, %v476
        %v533 = vpack.c.b16 %v479, %v477
        %v534 = vpack.c.b16 %v482, %v480
        %v535 = vpack.c.b16 %v483, %v481
        %v536 = vpack.c.b16 %v486, %v484
        %v537 = vpack.c.b16 %v487, %v485
        %v538 = vpack.c.b16 %v490, %v488
        %v539 = vpack.c.b16 %v491, %v489
        %v540 = vpack.c.b16 %v494, %v492
        %v541 = vpack.c.b16 %v495, %v493
        %v542 = vpack.c.b16 %v498, %v496
        %v543 = vpack.c.b16 %v499, %v497
        %v544 = vpack.c.b16 %v500, %v500
        %v545 = vpack.c.b16 %v501, %v501
        %v622 = vunpack.c.l.b16 %v341
        %v623 = vunpack.c.l.b16 %v342
        %v624 = vunpack.c.l.b16 %v343
        %v625 = vunpack.c.l.b16 %v344
        %v626 = vunpack.c.l.b16 %v345
        %v627 = vunpack.c.l.b16 %v346
        %v628 = vunpack.c.l.b16 %v347
        %v629 = vunpack.c.l.b16 %v348
        %v630 = vunpack.c.l.b16 %v349
        %v631 = vunpack.c.l.b16 %v350
        %v632 = vunpack.c.l.b16 %v351
        %v633 = vunpack.c.l.b16 %v352
        %v634 = vunpack.c.l.b16 %v353
        %v635 = vunpack.c.l.b16 %v354
        %v636 = vunpack.c.l.b16 %v355
        %v637 = vunpack.c.l.b16 %v356
        %v638 = vunpack.c.l.b16 %v357
        %v639 = vunpack.c.l.b16 %v358
        %v640 = vunpack.c.l.b16 %v359
        %v641 = vunpack.c.l.b16 %v360
        %v642 = vunpack.c.l.b16 %v361
        %v643 = vunpack.c.l.b16 %v362
        %v644 = vunpack.c.l.b16 %v363
        %v645 = vunpack.c.l.b16 %v364
        %v646 = vunpack.c.l.b16 %v365
        %v647 = vunpack.c.l.b16 %v366
        %v648 = vunpack.c.l.b16 %v367
        %v649 = vunpack.c.l.b16 %v368
        %v650 = vunpack.c.l.b16 %v369
        %v651 = vunpack.c.l.b16 %v370
        %v652 = vunpack.c.l.b16 %v371
        %v653 = vunpack.c.l.b16 %v372
        %v654 = vpack.c.b16 %v623, %v622
        %v655 = vpack.c.b16 %v625, %v624
        %v656 = vpack.c.b16 %v627, %v626
        %v657 = vpack.c.b16 %v629, %v628
        %v658 = vpack.c.b16 %v631, %v630
        %v659 = vpack.c.b16 %v633, %v632
        %v660 = vpack.c.b16 %v635, %v634
        %v661 = vpack.c.b16 %v637, %v636
        %v662 = vpack.c.b16 %v639, %v638
        %v663 = vpack.c.b16 %v641, %v640
        %v664 = vpack.c.b16 %v643, %v642
        %v665 = vpack.c.b16 %v645, %v644
        %v666 = vpack.c.b16 %v647, %v646
        %v667 = vpack.c.b16 %v649, %v648
        %v668 = vpack.c.b16 %v651, %v650
        %v669 = vpack.c.b16 %v653, %v652
        %686 = vmatprep.subr.bf16.mxu0 0
        %687 = vmatpush1.bf16.msra.mxu0 %v654
        %688 = vmatprep.subr.bf16.mxu0 0
        %689 = vmatpush1.bf16.msra.mxu0 %v655
        %690 = vmatprep.subr.bf16.mxu0 0
        %691 = vmatpush1.bf16.msra.mxu0 %v656
        %692 = vmatprep.subr.bf16.mxu0 0
        %693 = vmatpush1.bf16.msra.mxu0 %v657
        %694 = vmatprep.subr.bf16.mxu0 0
        %695 = vmatpush1.bf16.msra.mxu0 %v658
        %696 = vmatprep.subr.bf16.mxu0 0
        %697 = vmatpush1.bf16.msra.mxu0 %v659
        %698 = vmatprep.subr.bf16.mxu0 0
        %699 = vmatpush1.bf16.msra.mxu0 %v660
        %700 = vmatprep.subr.bf16.mxu0 0
        %701 = vmatpush1.bf16.msra.mxu0 %v661
        %702 = vmatprep.subr.bf16.mxu0 0
        %703 = vmatpush1.bf16.msra.mxu0 %v662
        %704 = vmatprep.subr.bf16.mxu0 0
        %705 = vmatpush1.bf16.msra.mxu0 %v663
        %706 = vmatprep.subr.bf16.mxu0 0
        %707 = vmatpush1.bf16.msra.mxu0 %v664
        %708 = vmatprep.subr.bf16.mxu0 0
        %709 = vmatpush1.bf16.msra.mxu0 %v665
        %710 = vmatprep.subr.bf16.mxu0 0
        %711 = vmatpush1.bf16.msra.mxu0 %v666
        %712 = vmatprep.subr.bf16.mxu0 0
        %713 = vmatpush1.bf16.msra.mxu0 %v667
        %714 = vmatprep.subr.bf16.mxu0 0
        %715 = vmatpush1.bf16.msra.mxu0 %v668
        %716 = vmatprep.subr.bf16.mxu0 0
        %717 = vmatpush1.bf16.msra.mxu0 %v669
        %718 = vmatprep.mubr.bf16.mxu0 %v503
        %719 = vmatmul.mubr.bf16.gmra.mrb[0].mxu0 %v502
        %v720 = vpop.f32.mrb[0].mxu0
        %v721 = vadd.f32 0.0, %v720
        %v722 = vpop.f32.mrb[0].mxu0
        %v723 = vpop.f32.mrb[0].mxu0
        %v724 = vadd.f32 0.0, %v723
        %v725 = vpop.f32.mrb[0].mxu0
        %726 = vmatprep.mubr.bf16.mxu0 %v505
        %727 = vmatmul.mubr.bf16.gmra.mrb[0].mxu0 %v504
        %v728 = vpop.f32.mrb[0].mxu0
        %v729 = vadd.f32 0.0, %v728
        %v730 = vpop.f32.mrb[0].mxu0
        %v731 = vpop.f32.mrb[0].mxu0
        %v732 = vadd.f32 0.0, %v731
        %v733 = vpop.f32.mrb[0].mxu0
        %734 = vmatprep.mubr.bf16.mxu0 %v507
        %735 = vmatmul.mubr.bf16.gmra.mrb[0].mxu0 %v506
        %v736 = vpop.f32.mrb[0].mxu0
        %v737 = vadd.f32 0.0, %v736
        %v738 = vpop.f32.mrb[0].mxu0
        %v739 = vpop.f32.mrb[0].mxu0
        %v740 = vadd.f32 0.0, %v739
        %v741 = vpop.f32.mrb[0].mxu0
        %742 = vmatprep.mubr.bf16.mxu0 %v509
        %743 = vmatmul.mubr.bf16.gmra.mrb[0].mxu0 %v508
        %v744 = vpop.f32.mrb[0].mxu0
        %v745 = vadd.f32 0.0, %v744
        %v746 = vpop.f32.mrb[0].mxu0
        %v747 = vpop.f32.mrb[0].mxu0
        %v748 = vadd.f32 0.0, %v747
        %v749 = vpop.f32.mrb[0].mxu0
        %750 = vmatprep.mubr.bf16.mxu0 %v511
        %751 = vmatmul.mubr.bf16.gmra.mrb[0].mxu0 %v510
        %v752 = vpop.f32.mrb[0].mxu0
        %v753 = vadd.f32 0.0, %v752
        %v754 = vpop.f32.mrb[0].mxu0
        %v755 = vpop.f32.mrb[0].mxu0
        %v756 = vadd.f32 0.0, %v755
        %v757 = vpop.f32.mrb[0].mxu0
        %758 = vmatprep.mubr.bf16.mxu0 %v513
        %759 = vmatmul.mubr.bf16.gmra.mrb[0].mxu0 %v512
        %v760 = vpop.f32.mrb[0].mxu0
        %v761 = vadd.f32 0.0, %v760
        %v762 = vpop.f32.mrb[0].mxu0
        %v763 = vpop.f32.mrb[0].mxu0
        %v764 = vadd.f32 0.0, %v763
        %v765 = vpop.f32.mrb[0].mxu0
        %766 = vmatprep.mubr.bf16.mxu0 %v515
        %767 = vmatmul.mubr.bf16.gmra.mrb[0].mxu0 %v514
        %v768 = vpop.f32.mrb[0].mxu0
        %v769 = vadd.f32 0.0, %v768
        %v770 = vpop.f32.mrb[0].mxu0
        %v771 = vpop.f32.mrb[0].mxu0
        %v772 = vadd.f32 0.0, %v771
        %v773 = vpop.f32.mrb[0].mxu0
        %774 = vmatprep.mubr.bf16.mxu0 %v517
        %775 = vmatmul.mubr.bf16.gmra.mrb[0].mxu0 %v516
        %v776 = vpop.f32.mrb[0].mxu0
        %v777 = vadd.f32 0.0, %v776
        %v778 = vpop.f32.mrb[0].mxu0
        %v779 = vpop.f32.mrb[0].mxu0
        %v780 = vadd.f32 0.0, %v779
        %v781 = vpop.f32.mrb[0].mxu0
        %782 = vmatprep.mubr.bf16.mxu0 %v519
        %783 = vmatmul.mubr.bf16.gmra.mrb[0].mxu0 %v518
        %v784 = vpop.f32.mrb[0].mxu0
        %v785 = vadd.f32 0.0, %v784
        %v786 = vpop.f32.mrb[0].mxu0
        %v787 = vpop.f32.mrb[0].mxu0
        %v788 = vadd.f32 0.0, %v787
        %v789 = vpop.f32.mrb[0].mxu0
        %790 = vmatprep.mubr.bf16.mxu0 %v521
        %791 = vmatmul.mubr.bf16.gmra.mrb[0].mxu0 %v520
        %v792 = vpop.f32.mrb[0].mxu0
        %v793 = vadd.f32 0.0, %v792
        %v794 = vpop.f32.mrb[0].mxu0
        %v795 = vpop.f32.mrb[0].mxu0
        %v796 = vadd.f32 0.0, %v795
        %v797 = vpop.f32.mrb[0].mxu0
        %798 = vmatprep.mubr.bf16.mxu0 %v523
        %799 = vmatmul.mubr.bf16.gmra.mrb[0].mxu0 %v522
        %v800 = vpop.f32.mrb[0].mxu0
        %v801 = vadd.f32 0.0, %v800
        %v802 = vpop.f32.mrb[0].mxu0
        %v803 = vpop.f32.mrb[0].mxu0
        %v804 = vadd.f32 0.0, %v803
        %v805 = vpop.f32.mrb[0].mxu0
        %806 = vmatprep.mubr.bf16.mxu0 %v525
        %807 = vmatmul.mubr.bf16.gmra.mrb[0].mxu0 %v524
        %v808 = vpop.f32.mrb[0].mxu0
        %v809 = vadd.f32 0.0, %v808
        %v810 = vpop.f32.mrb[0].mxu0
        %v811 = vpop.f32.mrb[0].mxu0
        %v812 = vadd.f32 0.0, %v811
        %v813 = vpop.f32.mrb[0].mxu0
        %814 = vmatprep.mubr.bf16.mxu0 %v527
        %815 = vmatmul.mubr.bf16.gmra.mrb[0].mxu0 %v526
        %v816 = vpop.f32.mrb[0].mxu0
        %v817 = vadd.f32 0.0, %v816
        %v818 = vpop.f32.mrb[0].mxu0
        %v819 = vpop.f32.mrb[0].mxu0
        %v820 = vadd.f32 0.0, %v819
        %v821 = vpop.f32.mrb[0].mxu0
        %822 = vmatprep.mubr.bf16.mxu0 %v529
        %823 = vmatmul.mubr.bf16.gmra.mrb[0].mxu0 %v528
        %v824 = vpop.f32.mrb[0].mxu0
        %v825 = vadd.f32 0.0, %v824
        %v826 = vpop.f32.mrb[0].mxu0
        %v827 = vpop.f32.mrb[0].mxu0
        %v828 = vadd.f32 0.0, %v827
        %v829 = vpop.f32.mrb[0].mxu0
        %830 = vmatprep.mubr.bf16.mxu0 %v531
        %831 = vmatmul.mubr.bf16.gmra.mrb[0].mxu0 %v530
        %v832 = vpop.f32.mrb[0].mxu0
        %v833 = vadd.f32 0.0, %v832
        %v834 = vpop.f32.mrb[0].mxu0
        %v835 = vpop.f32.mrb[0].mxu0
        %v836 = vadd.f32 0.0, %v835
        %v837 = vpop.f32.mrb[0].mxu0
        %838 = vmatprep.mubr.bf16.mxu0 %v533
        %839 = vmatmul.mubr.bf16.gmra.mrb[0].mxu0 %v532
        %v840 = vpop.f32.mrb[0].mxu0
        %v841 = vadd.f32 0.0, %v840
        %v842 = vpop.f32.mrb[0].mxu0
        %v843 = vpop.f32.mrb[0].mxu0
        %v844 = vadd.f32 0.0, %v843
        %v845 = vpop.f32.mrb[0].mxu0
        %846 = vmatprep.mubr.bf16.mxu0 %v535
        %847 = vmatmul.mubr.bf16.gmra.mrb[0].mxu0 %v534
        %v848 = vpop.f32.mrb[0].mxu0
        %v849 = vadd.f32 0.0, %v848
        %v850 = vpop.f32.mrb[0].mxu0
        %v851 = vpop.f32.mrb[0].mxu0
        %v852 = vadd.f32 0.0, %v851
        %v853 = vpop.f32.mrb[0].mxu0
        %854 = vmatprep.mubr.bf16.mxu0 %v537
        %855 = vmatmul.mubr.bf16.gmra.mrb[0].mxu0 %v536
        %v856 = vpop.f32.mrb[0].mxu0
        %v857 = vadd.f32 0.0, %v856
        %v858 = vpop.f32.mrb[0].mxu0
        %v859 = vpop.f32.mrb[0].mxu0
        %v860 = vadd.f32 0.0, %v859
        %v861 = vpop.f32.mrb[0].mxu0
        %862 = vmatprep.mubr.bf16.mxu0 %v539
        %863 = vmatmul.mubr.bf16.gmra.mrb[0].mxu0 %v538
        %v864 = vpop.f32.mrb[0].mxu0
        %v865 = vadd.f32 0.0, %v864
        %v866 = vpop.f32.mrb[0].mxu0
        %v867 = vpop.f32.mrb[0].mxu0
        %v868 = vadd.f32 0.0, %v867
        %v869 = vpop.f32.mrb[0].mxu0
        %870 = vmatprep.mubr.bf16.mxu0 %v541
        %871 = vmatmul.mubr.bf16.gmra.mrb[0].mxu0 %v540
        %v872 = vpop.f32.mrb[0].mxu0
        %v873 = vadd.f32 0.0, %v872
        %v874 = vpop.f32.mrb[0].mxu0
        %v875 = vpop.f32.mrb[0].mxu0
        %v876 = vadd.f32 0.0, %v875
        %v877 = vpop.f32.mrb[0].mxu0
        %878 = vmatprep.mubr.bf16.mxu0 %v543
        %879 = vmatmul.mubr.bf16.gmra.mrb[0].mxu0 %v542
        %v880 = vpop.f32.mrb[0].mxu0
        %v881 = vadd.f32 0.0, %v880
        %v882 = vpop.f32.mrb[0].mxu0
        %v883 = vpop.f32.mrb[0].mxu0
        %v884 = vadd.f32 0.0, %v883
        %v885 = vpop.f32.mrb[0].mxu0
        %886 = vmatprep.mubr.bf16.mxu0 %v545
        %887 = vmatmul.mubr.bf16.gmra.mrb[0].mxu0 %v544
        %v888 = vpop.f32.mrb[0].mxu0
        %v889 = vadd.f32 0.0, %v888
        %v890 = vpop.f32.mrb[0].mxu0
        %v891 = vpop.f32.mrb[0].mxu0
        %v892 = vpop.f32.mrb[0].mxu0
        %893 = vdwg.mxu0
        %v894 = vld [vmem:[#allocation7] sm:$0x1]
        %v896 = vlaneseq
        %v897 = vshrl.u32 %v896, 7
        %v898 = vsub.s32 0, %v897
        %v899 = vrot.slane %v894, %v898
        %v901 = vmul.f32 %v721, %v899
        %v902 = vmul.f32 %v724, %v899
        %v903 = vmul.f32 %v729, %v899
        %v904 = vmul.f32 %v732, %v899
        %v905 = vmul.f32 %v737, %v899
        %v906 = vmul.f32 %v740, %v899
        %v907 = vmul.f32 %v745, %v899
        %v908 = vmul.f32 %v748, %v899
        %v909 = vmul.f32 %v753, %v899
        %v910 = vmul.f32 %v756, %v899
        %v911 = vmul.f32 %v761, %v899
        %v912 = vmul.f32 %v764, %v899
        %v913 = vmul.f32 %v769, %v899
        %v914 = vmul.f32 %v772, %v899
        %v915 = vmul.f32 %v777, %v899
        %v916 = vmul.f32 %v780, %v899
        %v917 = vmul.f32 %v785, %v899
        %v918 = vmul.f32 %v788, %v899
        %v919 = vmul.f32 %v793, %v899
        %v920 = vmul.f32 %v796, %v899
        %v921 = vmul.f32 %v801, %v899
        %v922 = vmul.f32 %v804, %v899
        %v923 = vmul.f32 %v809, %v899
        %v924 = vmul.f32 %v812, %v899
        %v925 = vmul.f32 %v817, %v899
        %v926 = vmul.f32 %v820, %v899
        %v927 = vmul.f32 %v825, %v899
        %v928 = vmul.f32 %v828, %v899
        %v929 = vmul.f32 %v833, %v899
        %v930 = vmul.f32 %v836, %v899
        %v931 = vmul.f32 %v841, %v899
        %v932 = vmul.f32 %v844, %v899
        %v933 = vmul.f32 %v849, %v899
        %v934 = vmul.f32 %v852, %v899
        %v935 = vmul.f32 %v857, %v899
        %v936 = vmul.f32 %v860, %v899
        %v937 = vmul.f32 %v865, %v899
        %v938 = vmul.f32 %v868, %v899
        %v939 = vmul.f32 %v873, %v899
        %v940 = vmul.f32 %v876, %v899
        %v941 = vmul.f32 %v881, %v899
        %v942 = vmul.f32 %v884, %v899
        %v943 = vmul.f32 %v889, %v899
        %v944 = vld [vmem:[#allocation8] sm:$0x1]
        %v946 = vlaneseq
        %v947 = vshrl.u32 %v946, 7
        %v948 = vsub.s32 0, %v947
        %v949 = vrot.slane %v944, %v948
        %v951 = vadd.f32 %v901, %v949
        %v952 = vadd.f32 %v902, %v949
        %v953 = vadd.f32 %v903, %v949
        %v954 = vadd.f32 %v904, %v949
        %v955 = vadd.f32 %v905, %v949
        %v956 = vadd.f32 %v906, %v949
        %v957 = vadd.f32 %v907, %v949
        %v958 = vadd.f32 %v908, %v949
        %v959 = vadd.f32 %v909, %v949
        %v960 = vadd.f32 %v910, %v949
        %v961 = vadd.f32 %v911, %v949
        %v962 = vadd.f32 %v912, %v949
        %v963 = vadd.f32 %v913, %v949
        %v964 = vadd.f32 %v914, %v949
        %v965 = vadd.f32 %v915, %v949
        %v966 = vadd.f32 %v916, %v949
        %v967 = vadd.f32 %v917, %v949
        %v968 = vadd.f32 %v918, %v949
        %v969 = vadd.f32 %v919, %v949
        %v970 = vadd.f32 %v920, %v949
        %v971 = vadd.f32 %v921, %v949
        %v972 = vadd.f32 %v922, %v949
        %v973 = vadd.f32 %v923, %v949
        %v974 = vadd.f32 %v924, %v949
        %v975 = vadd.f32 %v925, %v949
        %v976 = vadd.f32 %v926, %v949
        %v977 = vadd.f32 %v927, %v949
        %v978 = vadd.f32 %v928, %v949
        %v979 = vadd.f32 %v929, %v949
        %v980 = vadd.f32 %v930, %v949
        %v981 = vadd.f32 %v931, %v949
        %v982 = vadd.f32 %v932, %v949
        %v983 = vadd.f32 %v933, %v949
        %v984 = vadd.f32 %v934, %v949
        %v985 = vadd.f32 %v935, %v949
        %v986 = vadd.f32 %v936, %v949
        %v987 = vadd.f32 %v937, %v949
        %v988 = vadd.f32 %v938, %v949
        %v989 = vadd.f32 %v939, %v949
        %v990 = vadd.f32 %v940, %v949
        %v991 = vadd.f32 %v941, %v949
        %v992 = vadd.f32 %v942, %v949
        %v993 = vadd.f32 %v943, %v949
        %v994 = vmax.f32 %v951, 0.0
        %v995 = vmax.f32 %v952, 0.0
        %v996 = vmax.f32 %v953, 0.0
        %v997 = vmax.f32 %v954, 0.0
        %v998 = vmax.f32 %v955, 0.0
        %v999 = vmax.f32 %v956, 0.0
        %v1000 = vmax.f32 %v957, 0.0
        %v1001 = vmax.f32 %v958, 0.0
        %v1002 = vmax.f32 %v959, 0.0
        %v1003 = vmax.f32 %v960, 0.0
        %v1004 = vmax.f32 %v961, 0.0
        %v1005 = vmax.f32 %v962, 0.0
        %v1006 = vmax.f32 %v963, 0.0
        %v1007 = vmax.f32 %v964, 0.0
        %v1008 = vmax.f32 %v965, 0.0
        %v1009 = vmax.f32 %v966, 0.0
        %v1010 = vmax.f32 %v967, 0.0
        %v1011 = vmax.f32 %v968, 0.0
        %v1012 = vmax.f32 %v969, 0.0
        %v1013 = vmax.f32 %v970, 0.0
        %v1014 = vmax.f32 %v971, 0.0
        %v1015 = vmax.f32 %v972, 0.0
        %v1016 = vmax.f32 %v973, 0.0
        %v1017 = vmax.f32 %v974, 0.0
        %v1018 = vmax.f32 %v975, 0.0
        %v1019 = vmax.f32 %v976, 0.0
        %v1020 = vmax.f32 %v977, 0.0
        %v1021 = vmax.f32 %v978, 0.0
        %v1022 = vmax.f32 %v979, 0.0
        %v1023 = vmax.f32 %v980, 0.0
        %v1024 = vmax.f32 %v981, 0.0
        %v1025 = vmax.f32 %v982, 0.0
        %v1026 = vmax.f32 %v983, 0.0
        %v1027 = vmax.f32 %v984, 0.0
        %v1028 = vmax.f32 %v985, 0.0
        %v1029 = vmax.f32 %v986, 0.0
        %v1030 = vmax.f32 %v987, 0.0
        %v1031 = vmax.f32 %v988, 0.0
        %v1032 = vmax.f32 %v989, 0.0
        %v1033 = vmax.f32 %v990, 0.0
        %v1034 = vmax.f32 %v991, 0.0
        %v1035 = vmax.f32 %v992, 0.0
        %v1036 = vmax.f32 %v993, 0.0
        %v1037 = vld [vmem:[#allocation10] sm:$0xff]
        %v1038 = vld [vmem:[#allocation10 + $0x8] sm:$0xff]
        %v1039 = vld [vmem:[#allocation10 + $0x10] sm:$0xff]
        %v1040 = vld [vmem:[#allocation10 + $0x18] sm:$0xff]
        %v1041 = vld [vmem:[#allocation10 + $0x20] sm:$0xff]
        %v1042 = vld [vmem:[#allocation10 + $0x28] sm:$0xff]
        %v1043 = vld [vmem:[#allocation10 + $0x30] sm:$0xff]
        %v1044 = vld [vmem:[#allocation10 + $0x38] sm:$0xff]
        %v1045 = vld [vmem:[#allocation10 + $0x40] sm:$0xff]
        %v1046 = vld [vmem:[#allocation10 + $0x48] sm:$0xff]
        %v1047 = vld [vmem:[#allocation10 + $0x50] sm:$0xff]
        %v1048 = vld [vmem:[#allocation10 + $0x58] sm:$0xff]
        %v1049 = vld [vmem:[#allocation10 + $0x60] sm:$0xff]
        %v1050 = vld [vmem:[#allocation10 + $0x68] sm:$0xff]
        %v1051 = vld [vmem:[#allocation10 + $0x70] sm:$0xff]
        %v1052 = vld [vmem:[#allocation10 + $0x78] sm:$0xff]
        %v1053 = vld [vmem:[#allocation10 + $0x80] sm:$0xff]
        %v1054 = vld [vmem:[#allocation10 + $0x88] sm:$0xff]
        %v1055 = vld [vmem:[#allocation10 + $0x90] sm:$0xff]
        %v1056 = vld [vmem:[#allocation10 + $0x98] sm:$0xff]
        %v1057 = vld [vmem:[#allocation10 + $0xa0] sm:$0xff]
        %v1058 = vld [vmem:[#allocation10 + $0xa8] sm:$0xff]
        %v1059 = vld [vmem:[#allocation10 + $0xb0] sm:$0xff]
        %v1060 = vld [vmem:[#allocation10 + $0xb8] sm:$0xff]
        %v1061 = vld [vmem:[#allocation10 + $0xc0] sm:$0xff]
        %v1062 = vld [vmem:[#allocation10 + $0xc8] sm:$0xff]
        %v1063 = vld [vmem:[#allocation10 + $0xd0] sm:$0xff]
        %v1064 = vld [vmem:[#allocation10 + $0xd8] sm:$0xff]
        %v1065 = vld [vmem:[#allocation10 + $0xe0] sm:$0xff]
        %v1066 = vld [vmem:[#allocation10 + $0xe8] sm:$0xff]
        %v1067 = vld [vmem:[#allocation10 + $0xf0] sm:$0xff]
        %v1068 = vld [vmem:[#allocation10 + $0xf8] sm:$0xff]
        %v1069 = vld [vmem:[#allocation10 + $0x100] sm:$0xff]
        %v1070 = vld [vmem:[#allocation10 + $0x108] sm:$0xff]
        %v1071 = vld [vmem:[#allocation10 + $0x110] sm:$0xff]
        %v1072 = vld [vmem:[#allocation10 + $0x118] sm:$0xff]
        %v1073 = vld [vmem:[#allocation10 + $0x120] sm:$0xff]
        %v1074 = vld [vmem:[#allocation10 + $0x128] sm:$0xff]
        %v1075 = vld [vmem:[#allocation10 + $0x130] sm:$0xff]
        %v1076 = vld [vmem:[#allocation10 + $0x138] sm:$0xff]
        %v1077 = vld [vmem:[#allocation10 + $0x140] sm:$0xff]
        %v1078 = vld [vmem:[#allocation10 + $0x148] sm:$0xff]
        %v1079 = vld [vmem:[#allocation10 + $0x150] sm:$0x3f]
        %1081 = vset.pattern.permute.xlu0 0
        %1082 = vperm.xlu0 %1081, %v1037
        %v1083 = vpop.permute.xlu0 %1082
        %1086 = vset.pattern.permute.xlu0 0
        %1087 = vperm.xlu0 %1086, %v1038
        %v1088 = vpop.permute.xlu0 %1087
        %1091 = vset.pattern.permute.xlu0 0
        %1092 = vperm.xlu0 %1091, %v1039
        %v1093 = vpop.permute.xlu0 %1092
        %1096 = vset.pattern.permute.xlu0 0
        %1097 = vperm.xlu0 %1096, %v1040
        %v1098 = vpop.permute.xlu0 %1097
        %1101 = vset.pattern.permute.xlu0 0
        %1102 = vperm.xlu0 %1101, %v1041
        %v1103 = vpop.permute.xlu0 %1102
        %1106 = vset.pattern.permute.xlu0 0
        %1107 = vperm.xlu0 %1106, %v1042
        %v1108 = vpop.permute.xlu0 %1107
        %1111 = vset.pattern.permute.xlu0 0
        %1112 = vperm.xlu0 %1111, %v1043
        %v1113 = vpop.permute.xlu0 %1112
        %1116 = vset.pattern.permute.xlu0 0
        %1117 = vperm.xlu0 %1116, %v1044
        %v1118 = vpop.permute.xlu0 %1117
        %1121 = vset.pattern.permute.xlu0 0
        %1122 = vperm.xlu0 %1121, %v1045
        %v1123 = vpop.permute.xlu0 %1122
        %1126 = vset.pattern.permute.xlu0 0
        %1127 = vperm.xlu0 %1126, %v1046
        %v1128 = vpop.permute.xlu0 %1127
        %1131 = vset.pattern.permute.xlu0 0
        %1132 = vperm.xlu0 %1131, %v1047
        %v1133 = vpop.permute.xlu0 %1132
        %1136 = vset.pattern.permute.xlu0 0
        %1137 = vperm.xlu0 %1136, %v1048
        %v1138 = vpop.permute.xlu0 %1137
        %1141 = vset.pattern.permute.xlu0 0
        %1142 = vperm.xlu0 %1141, %v1049
        %v1143 = vpop.permute.xlu0 %1142
        %1146 = vset.pattern.permute.xlu0 0
        %1147 = vperm.xlu0 %1146, %v1050
        %v1148 = vpop.permute.xlu0 %1147
        %1151 = vset.pattern.permute.xlu0 0
        %1152 = vperm.xlu0 %1151, %v1051
        %v1153 = vpop.permute.xlu0 %1152
        %1156 = vset.pattern.permute.xlu0 0
        %1157 = vperm.xlu0 %1156, %v1052
        %v1158 = vpop.permute.xlu0 %1157
        %1161 = vset.pattern.permute.xlu0 0
        %1162 = vperm.xlu0 %1161, %v1053
        %v1163 = vpop.permute.xlu0 %1162
        %1166 = vset.pattern.permute.xlu0 0
        %1167 = vperm.xlu0 %1166, %v1054
        %v1168 = vpop.permute.xlu0 %1167
        %1171 = vset.pattern.permute.xlu0 0
        %1172 = vperm.xlu0 %1171, %v1055
        %v1173 = vpop.permute.xlu0 %1172
        %1176 = vset.pattern.permute.xlu0 0
        %1177 = vperm.xlu0 %1176, %v1056
        %v1178 = vpop.permute.xlu0 %1177
        %1181 = vset.pattern.permute.xlu0 0
        %1182 = vperm.xlu0 %1181, %v1057
        %v1183 = vpop.permute.xlu0 %1182
        %1186 = vset.pattern.permute.xlu0 0
        %1187 = vperm.xlu0 %1186, %v1058
        %v1188 = vpop.permute.xlu0 %1187
        %1191 = vset.pattern.permute.xlu0 0
        %1192 = vperm.xlu0 %1191, %v1059
        %v1193 = vpop.permute.xlu0 %1192
        %1196 = vset.pattern.permute.xlu0 0
        %1197 = vperm.xlu0 %1196, %v1060
        %v1198 = vpop.permute.xlu0 %1197
        %1201 = vset.pattern.permute.xlu0 0
        %1202 = vperm.xlu0 %1201, %v1061
        %v1203 = vpop.permute.xlu0 %1202
        %1206 = vset.pattern.permute.xlu0 0
        %1207 = vperm.xlu0 %1206, %v1062
        %v1208 = vpop.permute.xlu0 %1207
        %1211 = vset.pattern.permute.xlu0 0
        %1212 = vperm.xlu0 %1211, %v1063
        %v1213 = vpop.permute.xlu0 %1212
        %1216 = vset.pattern.permute.xlu0 0
        %1217 = vperm.xlu0 %1216, %v1064
        %v1218 = vpop.permute.xlu0 %1217
        %1221 = vset.pattern.permute.xlu0 0
        %1222 = vperm.xlu0 %1221, %v1065
        %v1223 = vpop.permute.xlu0 %1222
        %1226 = vset.pattern.permute.xlu0 0
        %1227 = vperm.xlu0 %1226, %v1066
        %v1228 = vpop.permute.xlu0 %1227
        %1231 = vset.pattern.permute.xlu0 0
        %1232 = vperm.xlu0 %1231, %v1067
        %v1233 = vpop.permute.xlu0 %1232
        %1236 = vset.pattern.permute.xlu0 0
        %1237 = vperm.xlu0 %1236, %v1068
        %v1238 = vpop.permute.xlu0 %1237
        %1241 = vset.pattern.permute.xlu0 0
        %1242 = vperm.xlu0 %1241, %v1069
        %v1243 = vpop.permute.xlu0 %1242
        %1246 = vset.pattern.permute.xlu0 0
        %1247 = vperm.xlu0 %1246, %v1070
        %v1248 = vpop.permute.xlu0 %1247
        %1251 = vset.pattern.permute.xlu0 0
        %1252 = vperm.xlu0 %1251, %v1071
        %v1253 = vpop.permute.xlu0 %1252
        %1256 = vset.pattern.permute.xlu0 0
        %1257 = vperm.xlu0 %1256, %v1072
        %v1258 = vpop.permute.xlu0 %1257
        %1261 = vset.pattern.permute.xlu0 0
        %1262 = vperm.xlu0 %1261, %v1073
        %v1263 = vpop.permute.xlu0 %1262
        %1266 = vset.pattern.permute.xlu0 0
        %1267 = vperm.xlu0 %1266, %v1074
        %v1268 = vpop.permute.xlu0 %1267
        %1271 = vset.pattern.permute.xlu0 0
        %1272 = vperm.xlu0 %1271, %v1075
        %v1273 = vpop.permute.xlu0 %1272
        %1276 = vset.pattern.permute.xlu0 0
        %1277 = vperm.xlu0 %1276, %v1076
        %v1278 = vpop.permute.xlu0 %1277
        %1281 = vset.pattern.permute.xlu0 0
        %1282 = vperm.xlu0 %1281, %v1077
        %v1283 = vpop.permute.xlu0 %1282
        %1286 = vset.pattern.permute.xlu0 0
        %1287 = vperm.xlu0 %1286, %v1078
        %v1288 = vpop.permute.xlu0 %1287
        %1291 = vset.pattern.permute.xlu0 0
        %1292 = vperm.xlu0 %1291, %v1079
        %v1293 = vpop.permute.xlu0 %1292
        %v1295 = vmul.f32 %v994, %v1083
        %v1296 = vmul.f32 %v995, %v1088
        %v1297 = vmul.f32 %v996, %v1093
        %v1298 = vmul.f32 %v997, %v1098
        %v1299 = vmul.f32 %v998, %v1103
        %v1300 = vmul.f32 %v999, %v1108
        %v1301 = vmul.f32 %v1000, %v1113
        %v1302 = vmul.f32 %v1001, %v1118
        %v1303 = vmul.f32 %v1002, %v1123
        %v1304 = vmul.f32 %v1003, %v1128
        %v1305 = vmul.f32 %v1004, %v1133
        %v1306 = vmul.f32 %v1005, %v1138
        %v1307 = vmul.f32 %v1006, %v1143
        %v1308 = vmul.f32 %v1007, %v1148
        %v1309 = vmul.f32 %v1008, %v1153
        %v1310 = vmul.f32 %v1009, %v1158
        %v1311 = vmul.f32 %v1010, %v1163
        %v1312 = vmul.f32 %v1011, %v1168
        %v1313 = vmul.f32 %v1012, %v1173
        %v1314 = vmul.f32 %v1013, %v1178
        %v1315 = vmul.f32 %v1014, %v1183
        %v1316 = vmul.f32 %v1015, %v1188
        %v1317 = vmul.f32 %v1016, %v1193
        %v1318 = vmul.f32 %v1017, %v1198
        %v1319 = vmul.f32 %v1018, %v1203
        %v1320 = vmul.f32 %v1019, %v1208
        %v1321 = vmul.f32 %v1020, %v1213
        %v1322 = vmul.f32 %v1021, %v1218
        %v1323 = vmul.f32 %v1022, %v1223
        %v1324 = vmul.f32 %v1023, %v1228
        %v1325 = vmul.f32 %v1024, %v1233
        %v1326 = vmul.f32 %v1025, %v1238
        %v1327 = vmul.f32 %v1026, %v1243
        %v1328 = vmul.f32 %v1027, %v1248
        %v1329 = vmul.f32 %v1028, %v1253
        %v1330 = vmul.f32 %v1029, %v1258
        %v1331 = vmul.f32 %v1030, %v1263
        %v1332 = vmul.f32 %v1031, %v1268
        %v1333 = vmul.f32 %v1032, %v1273
        %v1334 = vmul.f32 %v1033, %v1278
        %v1335 = vmul.f32 %v1034, %v1283
        %v1336 = vmul.f32 %v1035, %v1288
        %v1337 = vmul.f32 %v1036, %v1293
        %v1338 = vpack.c.bf16 %v1296, %v1295
        %v1339 = vpack.c.bf16 %v1298, %v1297
        %v1340 = vpack.c.bf16 %v1300, %v1299
        %v1341 = vpack.c.bf16 %v1302, %v1301
        %v1342 = vpack.c.bf16 %v1304, %v1303
        %v1343 = vpack.c.bf16 %v1306, %v1305
        %v1344 = vpack.c.bf16 %v1308, %v1307
        %v1345 = vpack.c.bf16 %v1310, %v1309
        %v1346 = vpack.c.bf16 %v1312, %v1311
        %v1347 = vpack.c.bf16 %v1314, %v1313
        %v1348 = vpack.c.bf16 %v1316, %v1315
        %v1349 = vpack.c.bf16 %v1318, %v1317
        %v1350 = vpack.c.bf16 %v1320, %v1319
        %v1351 = vpack.c.bf16 %v1322, %v1321
        %v1352 = vpack.c.bf16 %v1324, %v1323
        %v1353 = vpack.c.bf16 %v1326, %v1325
        %v1354 = vpack.c.bf16 %v1328, %v1327
        %v1355 = vpack.c.bf16 %v1330, %v1329
        %v1356 = vpack.c.bf16 %v1332, %v1331
        %v1357 = vpack.c.bf16 %v1334, %v1333
        %v1358 = vpack.c.bf16 %v1336, %v1335
        %v1359 = vpack.c.bf16 %v1337, %v1337
        %v1382 = vunpack.c.l.b16 %v1338
        %v1383 = vunpack.c.h.b16 %v1338
        %v1384 = vunpack.c.l.b16 %v1339
        %v1385 = vunpack.c.h.b16 %v1339
        %v1386 = vunpack.c.l.b16 %v1340
        %v1387 = vunpack.c.h.b16 %v1340
        %v1388 = vunpack.c.l.b16 %v1341
        %v1389 = vunpack.c.h.b16 %v1341
        %v1390 = vunpack.c.l.b16 %v1342
        %v1391 = vunpack.c.h.b16 %v1342
        %v1392 = vunpack.c.l.b16 %v1343
        %v1393 = vunpack.c.h.b16 %v1343
        %v1394 = vunpack.c.l.b16 %v1344
        %v1395 = vunpack.c.h.b16 %v1344
        %v1396 = vunpack.c.l.b16 %v1345
        %v1397 = vunpack.c.h.b16 %v1345
        %v1398 = vunpack.c.l.b16 %v1346
        %v1399 = vunpack.c.h.b16 %v1346
        %v1400 = vunpack.c.l.b16 %v1347
        %v1401 = vunpack.c.h.b16 %v1347
        %v1402 = vunpack.c.l.b16 %v1348
        %v1403 = vunpack.c.h.b16 %v1348
        %v1404 = vunpack.c.l.b16 %v1349
        %v1405 = vunpack.c.h.b16 %v1349
        %v1406 = vunpack.c.l.b16 %v1350
        %v1407 = vunpack.c.h.b16 %v1350
        %v1408 = vunpack.c.l.b16 %v1351
        %v1409 = vunpack.c.h.b16 %v1351
        %v1410 = vunpack.c.l.b16 %v1352
        %v1411 = vunpack.c.h.b16 %v1352
        %v1412 = vunpack.c.l.b16 %v1353
        %v1413 = vunpack.c.h.b16 %v1353
        %v1414 = vunpack.c.l.b16 %v1354
        %v1415 = vunpack.c.h.b16 %v1354
        %v1416 = vunpack.c.l.b16 %v1355
        %v1417 = vunpack.c.h.b16 %v1355
        %v1418 = vunpack.c.l.b16 %v1356
        %v1419 = vunpack.c.h.b16 %v1356
        %v1420 = vunpack.c.l.b16 %v1357
        %v1421 = vunpack.c.h.b16 %v1357
        %v1422 = vunpack.c.l.b16 %v1358
        %v1423 = vunpack.c.h.b16 %v1358
        %v1424 = vunpack.c.l.b16 %v1359
        %v1425 = vpack.c.b16 %v1382, %v1382
        %v1426 = vpack.c.b16 %v1383, %v1383
        %v1427 = vpack.c.b16 %v1384, %v1384
        %v1428 = vpack.c.b16 %v1385, %v1385
        %v1429 = vpack.c.b16 %v1386, %v1386
        %v1430 = vpack.c.b16 %v1387, %v1387
        %v1431 = vpack.c.b16 %v1388, %v1388
        %v1432 = vpack.c.b16 %v1389, %v1389
        %v1433 = vpack.c.b16 %v1390, %v1390
        %v1434 = vpack.c.b16 %v1391, %v1391
        %v1435 = vpack.c.b16 %v1392, %v1392
        %v1436 = vpack.c.b16 %v1393, %v1393
        %v1437 = vpack.c.b16 %v1394, %v1394
        %v1438 = vpack.c.b16 %v1395, %v1395
        %v1439 = vpack.c.b16 %v1396, %v1396
        %v1440 = vpack.c.b16 %v1397, %v1397
        %v1441 = vpack.c.b16 %v1398, %v1398
        %v1442 = vpack.c.b16 %v1399, %v1399
        %v1443 = vpack.c.b16 %v1400, %v1400
        %v1444 = vpack.c.b16 %v1401, %v1401
        %v1445 = vpack.c.b16 %v1402, %v1402
        %v1446 = vpack.c.b16 %v1403, %v1403
        %v1447 = vpack.c.b16 %v1404, %v1404
        %v1448 = vpack.c.b16 %v1405, %v1405
        %v1449 = vpack.c.b16 %v1406, %v1406
        %v1450 = vpack.c.b16 %v1407, %v1407
        %v1451 = vpack.c.b16 %v1408, %v1408
        %v1452 = vpack.c.b16 %v1409, %v1409
        %v1453 = vpack.c.b16 %v1410, %v1410
        %v1454 = vpack.c.b16 %v1411, %v1411
        %v1455 = vpack.c.b16 %v1412, %v1412
        %v1456 = vpack.c.b16 %v1413, %v1413
        %v1457 = vpack.c.b16 %v1414, %v1414
        %v1458 = vpack.c.b16 %v1415, %v1415
        %v1459 = vpack.c.b16 %v1416, %v1416
        %v1460 = vpack.c.b16 %v1417, %v1417
        %v1461 = vpack.c.b16 %v1418, %v1418
        %v1462 = vpack.c.b16 %v1419, %v1419
        %v1463 = vpack.c.b16 %v1420, %v1420
        %v1464 = vpack.c.b16 %v1421, %v1421
        %v1465 = vpack.c.b16 %v1422, %v1422
        %v1466 = vpack.c.b16 %v1423, %v1423
        %v1467 = vpack.c.b16 %v1424, %v1424
        %1511 = vst [vmem:[%s296] sm:$0xf] %v1425
        %1512 = vst [vmem:[%s296 + $0x4] sm:$0xf] %v1426
        %1513 = vst [vmem:[%s296 + $0x8] sm:$0xf] %v1427
        %1514 = vst [vmem:[%s296 + $0xc] sm:$0xf] %v1428
        %1515 = vst [vmem:[%s296 + $0x10] sm:$0xf] %v1429
        %1516 = vst [vmem:[%s296 + $0x14] sm:$0xf] %v1430
        %1517 = vst [vmem:[%s296 + $0x18] sm:$0xf] %v1431
        %1518 = vst [vmem:[%s296 + $0x1c] sm:$0xf] %v1432
        %1519 = vst [vmem:[%s296 + $0x20] sm:$0xf] %v1433
        %1520 = vst [vmem:[%s296 + $0x24] sm:$0xf] %v1434
        %1521 = vst [vmem:[%s296 + $0x28] sm:$0xf] %v1435
        %1522 = vst [vmem:[%s296 + $0x2c] sm:$0xf] %v1436
        %1523 = vst [vmem:[%s296 + $0x30] sm:$0xf] %v1437
        %1524 = vst [vmem:[%s296 + $0x34] sm:$0xf] %v1438
        %1525 = vst [vmem:[%s296 + $0x38] sm:$0xf] %v1439
        %1526 = vst [vmem:[%s296 + $0x3c] sm:$0xf] %v1440
        %1527 = vst [vmem:[%s296 + $0x40] sm:$0xf] %v1441
        %1528 = vst [vmem:[%s296 + $0x44] sm:$0xf] %v1442
        %1529 = vst [vmem:[%s296 + $0x48] sm:$0xf] %v1443
        %1530 = vst [vmem:[%s296 + $0x4c] sm:$0xf] %v1444
        %1531 = vst [vmem:[%s296 + $0x50] sm:$0xf] %v1445
        %1532 = vst [vmem:[%s296 + $0x54] sm:$0xf] %v1446
        %1533 = vst [vmem:[%s296 + $0x58] sm:$0xf] %v1447
        %1534 = vst [vmem:[%s296 + $0x5c] sm:$0xf] %v1448
        %1535 = vst [vmem:[%s296 + $0x60] sm:$0xf] %v1449
        %1536 = vst [vmem:[%s296 + $0x64] sm:$0xf] %v1450
        %1537 = vst [vmem:[%s296 + $0x68] sm:$0xf] %v1451
        %1538 = vst [vmem:[%s296 + $0x6c] sm:$0xf] %v1452
        %1539 = vst [vmem:[%s296 + $0x70] sm:$0xf] %v1453
        %1540 = vst [vmem:[%s296 + $0x74] sm:$0xf] %v1454
        %1541 = vst [vmem:[%s296 + $0x78] sm:$0xf] %v1455
        %1542 = vst [vmem:[%s296 + $0x7c] sm:$0xf] %v1456
        %1543 = vst [vmem:[%s296 + $0x80] sm:$0xf] %v1457
        %1544 = vst [vmem:[%s296 + $0x84] sm:$0xf] %v1458
        %1545 = vst [vmem:[%s296 + $0x88] sm:$0xf] %v1459
        %1546 = vst [vmem:[%s296 + $0x8c] sm:$0xf] %v1460
        %1547 = vst [vmem:[%s296 + $0x90] sm:$0xf] %v1461
        %1548 = vst [vmem:[%s296 + $0x94] sm:$0xf] %v1462
        %1549 = vst [vmem:[%s296 + $0x98] sm:$0xf] %v1463
        %1550 = vst [vmem:[%s296 + $0x9c] sm:$0xf] %v1464
        %1551 = vst [vmem:[%s296 + $0xa0] sm:$0xf] %v1465
        %1552 = vst [vmem:[%s296 + $0xa4] sm:$0xf] %v1466
        %1553 = vst [vmem:[%s296 + $0xa8] sm:$0x7] %v1467
        %s1554 = sand.u32 %s142, 1
        %s1555 = scalar_lea.sflag [#allocation4], %s1554
        %s1556 = sand.u32 %s142, 1
        %s1557 = smul.addr %s1556, 172
        %s1558 = scalar_lea.vmem [#allocation11], %s1557
        // Predicated region
        $region61: #{tpu_custom_call.1} parent=39 // pred_check
          %p1559 = pneg %p152
        $region62: #{tpu_custom_call.1} parent=39 // pred_check_branch
          %1561 = sbr.rel (%p1559) target = $region64
        $region63: #{tpu_custom_call.1} parent=39 // pred_region
          %s1563 = ssub.s32 2752, 2752
          %1564 = vsyncadd %s1555, %s1563
          %s1565 = smul.addr %s24, 43
          %s1566 = smul.addr %s1565, 64
          %s1567 = scalar_lea.hbm %s5, %s1566
          %s1568 = sshll.u32 %s1558, 4
          %s1569 = int_to_ptr.vmem [resolvable:$true] %s1568
          %1574 = dma.vmem_to_hbm [thread:$0]  %s1569, 2752, %s1567, %s1555, 64, 64, 4
        $region64: #{tpu_custom_call.1} parent=39 // pred_fallthru
          _
      $region40: #{tpu_custom_call.1} parent=5 // pred_fallthru
        _
      %p1575 = scmp.le.s32.totalorder 2, %s19
      // Predicated region
      $region65: #{tpu_custom_call.1} parent=5 // pred_check
        %p1576 = pneg %p1575
      $region66: #{tpu_custom_call.1} parent=5 // pred_check_branch
        %1578 = sbr.rel (%p1576) target = $region68
      $region67: #{tpu_custom_call.1} parent=5 // pred_region
        %s1579 = ssub.s32 %s19, 2
        // Predicated region
        $region69: #{tpu_custom_call.1} parent=67 // pred_check
          %p1580 = pneg %p158
        $region70: #{tpu_custom_call.1} parent=67 // pred_check_branch
          %1582 = sbr.rel (%p1580) target = $region72
        $region71: #{tpu_custom_call.1} parent=67 // pred_region
          %s1583 = sand.u32 %s143, 1
          %s1584 = scalar_lea.sflag [#allocation4], %s1583
          %s1585 = sand.u32 %s143, 1
          %s1586 = smul.addr %s1585, 172
          %s1587 = scalar_lea.vmem [#allocation11], %s1586
          %1588 = dma.done %s1584, 2752
        $region72: #{tpu_custom_call.1} parent=67 // pred_fallthru
          _
      $region68: #{tpu_custom_call.1} parent=5 // pred_fallthru
        _
    $region6: #{tpu_custom_call.1} parent=1 // loop_footer
      %s23 = sadd.s32 1, %s19
    $region7: #{tpu_custom_call.1} parent=1 // loop_footer_branch
      %18 = sbr.rel target = $region3
    $region8: #{tpu_custom_call.1} parent=1 // loop_exit
      _
    %1589 = vsyncpa [#allocation3], 1
    %s1590 = scalar_lea.sflag [#allocation3], 1
    %1591 = vsyncpa %s1590, 1
    %1592 = vsyncpa [#allocation6], 1
    %1593 = vsyncpa [#allocation9], 1
    %1594 = vsyncpa [#allocation4], 1
    %s1595 = scalar_lea.sflag [#allocation4], 1
    %1596 = vsyncpa %s1595, 1

</llo_original>
